<compile_context>
chip_gen: v6e
topology: v6e:2x2x1
jax: 0.10.0
libtpu: 0.0.40
codegen_flags: <defaults>
</compile_context>

<pallas_src>
import functools

import jax
import jax.numpy as jnp
from jax.experimental import pallas as pl
from jax.experimental.pallas import tpu as pltpu

LANE = 128


def _round_up(x, m):
    return ((x + m - 1) // m) * m


def _choose_tiles(n):
    """Pad N to a streaming-friendly multiple and pick (n_pad, tm, tk).

    tk (streamed-A lane axis) is the mem-bound lever -> prefer 512 (>=85% of
    HBM roofline vs ~63% at 256).  tm is kept small enough that the row-tile
    'parallel' axis has >=2 steps so both v7x TensorCores get work.
    """
    if n >= 512:
        base = 512
    elif n >= 256:
        base = 256
    else:
        base = 128
    n_pad = _round_up(n, base)
    tk = base
    tm = min(512, tk)
    while tm > 128 and n_pad // tm < 2:
        tm //= 2
    return n_pad, tm, tk


def _vmem_cap_bytes():
    """Generation-aware scoped-VMEM budget (v7x: 64 MiB phys; v5e/v6e: 128 MiB)."""
    phys = 64 << 20
    try:
        phys = int(pltpu.get_tpu_info().vmem_capacity_bytes)
    except Exception:
        pass
    if phys >= (128 << 20):
        return 100 << 20          # v5e / v6e: scoped defaults (16/32 MiB) are tiny
    return 48 << 20               # v7x: leave headroom under 64 MiB


def _spec(block_shape, index_map, buffers=None):
    """BlockSpec helper; buffers=1 single-buffers grid-(near-)constant blocks."""
    if buffers is None:
        return pl.BlockSpec(block_shape, index_map)
    try:
        return pl.BlockSpec(block_shape, index_map, pipeline_mode=pl.Buffered(buffers))
    except TypeError:             # graceful fallback if pipeline_mode unsupported
        return pl.BlockSpec(block_shape, index_map)


# ---------------------------------------------------------------------------
# Pallas kernels
# ---------------------------------------------------------------------------

def _degree_cast_kernel(a_ref, d_ref, abf_ref, *, normalization):
    """Single pass over A: emit bf16(A) and the degree-scale vector."""
    k = pl.program_id(1)
    a = a_ref[...]
    abf_ref[...] = a.astype(abf_ref.dtype)

    @pl.when(k == 0)
    def _():
        d_ref[...] = jnp.zeros_like(d_ref)

    d_ref[...] += jnp.sum(a, axis=1, keepdims=True)

    @pl.when(k == pl.num_programs(1) - 1)
    def _():
        deg = jnp.maximum(d_ref[...] + 1.0, 1e-12)      # +1 for the self-loop
        if normalization == 'sym':
            d_ref[...] = jax.lax.rsqrt(deg)
        else:                                           # 'rw'
            d_ref[...] = 1.0 / deg


def _linear_kernel(x_ref, w_ref, b_ref, d_ref, o_ref, *, scale_cols):
    """H' = (X @ W + b) [* d]  in f32, emitted bf16 for the MXU aggregation."""
    h = jnp.dot(x_ref[...], w_ref[...], preferred_element_type=jnp.float32)
    h = h + b_ref[...]
    if scale_cols:                                      # 'sym': fold D^-1/2 into H
        h = h * d_ref[...]
    o_ref[...] = h.astype(o_ref.dtype)


def _aggregate_kernel(*refs, tk, resident_h, apply_relu, add_skip):
    """o += A_tile @ H'; last K step: o = d_r*(o + H'_self) [relu] [+ skip]."""
    if add_skip:
        a_ref, h_ref, hself_ref, dr_ref, skip_ref, o_ref = refs
    else:
        a_ref, h_ref, hself_ref, dr_ref, o_ref = refs
        skip_ref = None

    k = pl.program_id(1)

    @pl.when(k == 0)
    def _():
        o_ref[...] = jnp.zeros_like(o_ref)              # o block is resident across k

    if resident_h:
        kstart = pl.multiple_of(k * tk, tk)
        h_blk = h_ref[pl.ds(kstart, tk), :]             # slice K chunk of resident H'
    else:
        h_blk = h_ref[...]                              # streamed (tk, d) chunk

    o_ref[...] += jnp.dot(a_ref[...], h_blk, preferred_element_type=jnp.float32)

    @pl.when(k == pl.num_programs(1) - 1)
    def _():
        # self-loop term + row scaling (folded A_norm), then ReLU / residual.
        y = (o_ref[...] + hself_ref[...].astype(jnp.float32)) * dr_ref[...]
        if apply_relu:
            y = jnp.maximum(y, 0.0)
        if add_skip:
            y = y + skip_ref[...]
        o_ref[...] = y


# ---------------------------------------------------------------------------
# Wrappers
# ---------------------------------------------------------------------------

def degree_and_cast(adj, *, normalization, tm, tk):
    n = adj.shape[0]
    return pl.pallas_call(
        functools.partial(_degree_cast_kernel, normalization=normalization),
        out_shape=(jax.ShapeDtypeStruct((n, 1), jnp.float32),
                   jax.ShapeDtypeStruct((n, n), jnp.bfloat16)),
        grid=(n // tm, n // tk),
        in_specs=[pl.BlockSpec((tm, tk), lambda i, k: (i, k))],
        out_specs=(pl.BlockSpec((tm, 1), lambda i, k: (i, 0)),
                   pl.BlockSpec((tm, tk), lambda i, k: (i, k))),
        compiler_params=pltpu.CompilerParams(
            dimension_semantics=("parallel", "arbitrary"),
            vmem_limit_bytes=_vmem_cap_bytes()),
    )(adj)


def linear(x, w, b, d_scale, *, scale_cols, tm):
    n, d_in = x.shape
    d_out = w.shape[1]
    return pl.pallas_call(
        functools.partial(_linear_kernel, scale_cols=scale_cols),
        out_shape=jax.ShapeDtypeStruct((n, d_out), jnp.bfloat16),
        grid=(n // tm,),
        in_specs=[pl.BlockSpec((tm, d_in), lambda i: (i, 0)),
                  _spec((d_in, d_out), lambda i: (0, 0), buffers=1),   # W: constant
                  _spec((1, d_out), lambda i: (0, 0), buffers=1),      # b: constant
                  pl.BlockSpec((tm, 1), lambda i: (i, 0))],
        out_specs=pl.BlockSpec((tm, d_out), lambda i: (i, 0)),
        compiler_params=pltpu.CompilerParams(dimension_semantics=("parallel",)),
    )(x, w, b, d_scale)


def gcn_aggregate(a_bf16, h, d_scale, skip=None, *, apply_relu, tm, tk):
    n = a_bf16.shape[0]
    d = h.shape[1]
    add_skip = skip is not None
    cap = _vmem_cap_bytes()

    # H' fully VMEM-resident (single-buffered) unless it hogs VMEM; otherwise
    # stream (tk, d) chunks along the reduction axis (extra traffic is tiny vs
    # the N^2 bf16 A stream).
    resident_h = (n * d * 2) <= cap // 4

    in_specs = [pl.BlockSpec((tm, tk), lambda i, k: (i, k))]           # A bf16 stream
    if resident_h:
        in_specs.append(_spec((n, d), lambda i, k: (0, 0), buffers=1))  # H' resident
    else:
        in_specs.append(pl.BlockSpec((tk, d), lambda i, k: (k, 0)))     # H' streamed
    in_specs.append(pl.BlockSpec((tm, d), lambda i, k: (i, 0)))        # H' self-loop rows
    in_specs.append(pl.BlockSpec((tm, 1), lambda i, k: (i, 0)))        # d_r
    args = [a_bf16, h, h, d_scale]
    if add_skip:
        in_specs.append(_spec((tm, d), lambda i, k: (i, 0), buffers=1))
        args.append(skip)

    # NOTE: if profiling shows exposed DMA on A after enlarging tk, bump the A
    # spec to pipeline_mode=pl.Buffered(3).
    return pl.pallas_call(
        functools.partial(_aggregate_kernel, tk=tk, resident_h=resident_h,
                          apply_relu=apply_relu, add_skip=add_skip),
        out_shape=jax.ShapeDtypeStruct((n, d), jnp.float32),
        grid=(n // tm, n // tk),
        in_specs=in_specs,
        out_specs=pl.BlockSpec((tm, d), lambda i, k: (i, 0)),
        compiler_params=pltpu.CompilerParams(
            dimension_semantics=("parallel", "arbitrary"),
            vmem_limit_bytes=cap),
    )(*args)


# ---------------------------------------------------------------------------
# Parameters & forward
# ---------------------------------------------------------------------------

def init_stack_gnn_params(key, input_dim, hidden_dim, output_dim, num_layers):
    """Xavier-uniform weights [in,out] (transposed vs nn.Linear); default-uniform bias."""
    dims = [input_dim] + [hidden_dim] * (num_layers - 1) + [output_dim]
    params = []
    for i in range(num_layers):
        fan_in, fan_out = dims[i], dims[i + 1]
        key, kw, kb = jax.random.split(key, 3)
        bound_w = (6.0 / (fan_in + fan_out)) ** 0.5
        w = jax.random.uniform(kw, (fan_in, fan_out), jnp.float32, -bound_w, bound_w)
        bound_b = 1.0 / (fan_in ** 0.5)
        b = jax.random.uniform(kb, (1, fan_out), jnp.float32, -bound_b, bound_b)
        params.append((w, b))
    return params


def _pad_to(x, rows, cols):
    r, c = x.shape
    return jnp.pad(x, ((0, rows - r), (0, cols - c)))


def stack_gnn_forward(adj, feature_matrix, params, *,
                      normalization='sym', residual=True):
    """Mirrors StackGNN.forward (eval mode: dropout = identity)."""
    n = adj.shape[0]
    num_layers = len(params)
    n_pad, tm, tk = _choose_tiles(n)

    # Pad the graph to tile multiples (exact: padded rows/cols are zero and
    # never feed back into real rows), then one streaming pass over A.
    adj_p = _pad_to(adj.astype(jnp.float32), n_pad, n_pad)
    d_scale, a_bf16 = degree_and_cast(adj_p, normalization=normalization, tm=tm, tk=tk)

    in_dim = feature_matrix.shape[1]
    x = _pad_to(feature_matrix.astype(jnp.float32), n_pad, _round_up(in_dim, LANE))

    scale_cols = (normalization == 'sym')
    for i, (w, b) in enumerate(params):
        is_last = i == num_layers - 1
        is_residual_layer = residual and (0 < i < num_layers - 1)
        d_in_p = _round_up(w.shape[0], LANE)
        d_out_p = _round_up(w.shape[1], LANE)
        w_p = _pad_to(w, d_in_p, d_out_p)
        b_p = _pad_to(b, 1, d_out_p)

        h = linear(x, w_p, b_p, d_scale, scale_cols=scale_cols, tm=tm)   # bf16 H'
        x = gcn_aggregate(a_bf16, h, d_scale,
                          skip=x if is_residual_layer else None,
                          apply_relu=not is_last,
                          tm=tm, tk=tk)
        # dropout between layers: identity in eval mode.

    out_dim = params[-1][0].shape[1]
    return x[:n, :out_dim]


# ---------------------------------------------------------------------------
# Pure-JAX reference (same folded normalization + bf16 quantization)
# ---------------------------------------------------------------------------

def reference_forward(adj, x, params, *, normalization='sym', residual=True):
    deg = jnp.maximum(jnp.sum(adj, axis=1) + 1.0, 1e-12)
    d = jax.lax.rsqrt(deg) if normalization == 'sym' else 1.0 / deg
    a_bf = adj.astype(jnp.bfloat16).astype(jnp.float32)
    num_layers = len(params)
    for i, (w, b) in enumerate(params):
        is_last = i == num_layers - 1
        is_res = residual and (0 < i < num_layers - 1)
        h = jnp.dot(x, w, precision=jax.lax.Precision.HIGHEST) + b
        if normalization == 'sym':
            h = h * d[:, None]
        h = h.astype(jnp.bfloat16).astype(jnp.float32)
        y = (jnp.dot(a_bf, h, precision=jax.lax.Precision.HIGHEST) + h) * d[:, None]
        if not is_last:
            y = jnp.maximum(y, 0.0)
        if is_res:
            y = y + x
        x = y
    return x


# ---------------------------------------------------------------------------
# Demo
# ---------------------------------------------------------------------------

if __name__ == "__main__":
    num_nodes = 700          # not a multiple of 128: exercises pad-to-tile path
    input_dim = 8
    hidden_dim = 32
    output_dim = 16
    num_layers = 3           # input GCN + residual GCN + output GCN
    normalization = 'sym'
    residual = True

    key = jax.random.PRNGKey(0)
    k_adj, k_feat, k_param = jax.random.split(key, 3)

    # Symmetric dense adjacency (0/1), zero diagonal.
    a_rand = jax.random.bernoulli(k_adj, p=0.05, shape=(num_nodes, num_nodes))
    adj = jnp.triu(a_rand.astype(jnp.float32), k=1)
    adj = adj + adj.T

    features = jax.random.normal(k_feat, (num_nodes, input_dim), jnp.float32)
    params = init_stack_gnn_params(k_param, input_dim, hidden_dim,
                                   output_dim, num_layers)

    out = stack_gnn_forward(adj, features, params,
                            normalization=normalization, residual=residual)
    out = jax.block_until_ready(out)

    assert out.shape == (num_nodes, output_dim), out.shape
    assert out.dtype == jnp.float32
    assert bool(jnp.all(jnp.isfinite(out)))

    ref = reference_forward(adj, features, params,
                            normalization=normalization, residual=residual)
    rel = float(jnp.linalg.norm(out - ref) / (jnp.linalg.norm(ref) + 1e-12))
    assert rel < 5e-2, f"relative error vs reference: {rel}"

    print("KERNEL_OK")
</pallas_src>

<mosaic_0001>
module attributes {stable_mosaic.version = 11 : i64} {
  func.func @_degree_cast_kernel(%arg0: i32, %arg1: i32, %arg2: memref<512x512xf32, #tpu.memory_space<vmem>>, %arg3: memref<512x1xf32, #tpu.memory_space<vmem>>, %arg4: memref<512x512xbf16, #tpu.memory_space<vmem>>) attributes {dimension_semantics = [#tpu.dimension_semantics<parallel>, #tpu.dimension_semantics<arbitrary>], iteration_bounds = array<i64: 2, 2>, scalar_prefetch = 0 : i64, scratch_operands = 0 : i64, tpu.core_type = #tpu.core_type<tc>, window_params = [{transform_indices = @transform_0, window_bounds = array<i64: 512, 512>}, {transform_indices = @transform_1, window_bounds = array<i64: 512, 1>}, {transform_indices = @transform_2, window_bounds = array<i64: 512, 512>}]} {
    %c0 = arith.constant 0 : index
    %c0_0 = arith.constant 0 : index
    %0 = vector.load %arg2[%c0, %c0_0] : memref<512x512xf32, #tpu.memory_space<vmem>>, vector<512x512xf32>
    %1 = arith.truncf %0 : vector<512x512xf32> to vector<512x512xbf16>
    %c0_1 = arith.constant 0 : index
    %c0_2 = arith.constant 0 : index
    %2 = vector.load %arg4[%c0_1, %c0_2] : memref<512x512xbf16, #tpu.memory_space<vmem>>, vector<512x512xbf16>
    tpu.vector_store %arg4[%c0_1, %c0_2], %1 {strides = array<i32>} : memref<512x512xbf16, #tpu.memory_space<vmem>>, vector<512x512xbf16>,
    %c0_i32 = arith.constant 0 : i32
    %3 = arith.cmpi eq, %arg1, %c0_i32 : i32
    %4 = arith.extui %3 : i1 to i32
    %c0_i32_3 = arith.constant 0 : i32
    %5 = arith.cmpi ne, %4, %c0_i32_3 : i32
    scf.if %5 {
      %cst_9 = arith.constant 0.000000e+00 : f32
      %14 = vector.broadcast %cst_9 : f32 to vector<512x1xf32>
      %c0_10 = arith.constant 0 : index
      %c0_11 = arith.constant 0 : index
      %15 = vector.load %arg3[%c0_10, %c0_11] : memref<512x1xf32, #tpu.memory_space<vmem>>, vector<512x1xf32>
      tpu.vector_store %arg3[%c0_10, %c0_11], %14 {strides = array<i32>} : memref<512x1xf32, #tpu.memory_space<vmem>>, vector<512x1xf32>,
    } else {
    }
    %c0_4 = arith.constant 0 : index
    %c0_5 = arith.constant 0 : index
    %6 = vector.load %arg3[%c0_4, %c0_5] : memref<512x1xf32, #tpu.memory_space<vmem>>, vector<512x1xf32>
    %cst = arith.constant dense<0.000000e+00> : vector<512xf32>
    %7 = vector.multi_reduction <add>, %0, %cst [1] : vector<512x512xf32> to vector<512xf32>
    %8 = vector.shape_cast %7 : vector<512xf32> to vector<512x1xf32>
    %9 = arith.addf %6, %8 : vector<512x1xf32>
    %c0_6 = arith.constant 0 : index
    %c0_7 = arith.constant 0 : index
    %10 = vector.load %arg3[%c0_6, %c0_7] : memref<512x1xf32, #tpu.memory_space<vmem>>, vector<512x1xf32>
    tpu.vector_store %arg3[%c0_6, %c0_7], %9 {strides = array<i32>} : memref<512x1xf32, #tpu.memory_space<vmem>>, vector<512x1xf32>,
    %c1_i32 = arith.constant 1 : i32
    %11 = arith.cmpi eq, %arg1, %c1_i32 : i32
    %12 = arith.extui %11 : i1 to i32
    %c0_i32_8 = arith.constant 0 : i32
    %13 = arith.cmpi ne, %12, %c0_i32_8 : i32
    scf.if %13 {
      %c0_9 = arith.constant 0 : index
      %c0_10 = arith.constant 0 : index
      %14 = vector.load %arg3[%c0_9, %c0_10] : memref<512x1xf32, #tpu.memory_space<vmem>>, vector<512x1xf32>
      %cst_11 = arith.constant 1.000000e+00 : f32
      %15 = vector.broadcast %cst_11 : f32 to vector<512x1xf32>
      %16 = arith.addf %14, %15 : vector<512x1xf32>
      %cst_12 = arith.constant 9.99999996E-13 : f32
      %17 = vector.broadcast %cst_12 : f32 to vector<512x1xf32>
      %18 = arith.maximumf %16, %17 : vector<512x1xf32>
      %19 = math.rsqrt %18 : vector<512x1xf32>
      %c0_13 = arith.constant 0 : index
      %c0_14 = arith.constant 0 : index
      %20 = vector.load %arg3[%c0_13, %c0_14] : memref<512x1xf32, #tpu.memory_space<vmem>>, vector<512x1xf32>
      tpu.vector_store %arg3[%c0_13, %c0_14], %19 {strides = array<i32>} : memref<512x1xf32, #tpu.memory_space<vmem>>, vector<512x1xf32>,
    } else {
    }
    return
  }
  func.func @transform_0(%arg0: i32, %arg1: i32) -> (i32, i32) {
    %c0_i32 = arith.constant 0 : i32
    return %arg0, %arg1 : i32, i32
  }
  func.func @transform_1(%arg0: i32, %arg1: i32) -> (i32, i32) {
    %c0_i32 = arith.constant 0 : i32
    %c0_i32_0 = arith.constant 0 : i32
    return %arg0, %c0_i32 : i32, i32
  }
  func.func @transform_2(%arg0: i32, %arg1: i32) -> (i32, i32) {
    %c0_i32 = arith.constant 0 : i32
    return %arg0, %arg1 : i32, i32
  }
}

</mosaic_0001>

<llo_original>
// kernel: tpu_custom_call.1
$region0: #{tpu_custom_call.1}
  #allocation0 [shape = 'u32[]', space=smem, size = 0x4, offset = 0x4, fixed_abs, tag = 'smem constant byte address 0x4 - core index']
  #allocation1 [shape = 'u32[144,128]{1,0:T(1,128)}', space=vmem, size = 0x12000, scoped, tag = 'internal scratch']
  %s0 = inlined_call_operand.hbm [shape: f32[1024,1024], index: 0, kind: input, shape index: {}]
  %s1 = inlined_call_operand.vmem [shape: f32[1024,1], index: 1, kind: output, shape index: {0}]
  %s2 = inlined_call_operand.hbm [shape: bf16[1024,1024], index: 2, kind: output, shape index: {1}]
  %3 = xla_tuple %s1, %s2
  %s4 = sld [smem:[#allocation0]]
  $region57: #{tpu_custom_call.1} parent=0
    _
  %s6 = ssub.s32 1, %s4
  %s7 = scalar_select 0, %s6, %s4
  $region1: #{tpu_custom_call.1} parent=0
    #allocation2 [shape = 'u8[2097152]{0}', space=vmem, size = 0x200000, scoped, tag = 'input window, operand 0']
    #allocation3 [shape = 's32[2]{0}', space=sflag, size = 0x8, scoped, tag = 'scoped memory for tpu_custom_call.1']
    #allocation4 [shape = 's32[2]{0}', space=sflag, size = 0x8, scoped, tag = 'scoped memory for tpu_custom_call.1']
    #allocation5 [shape = 'u8[1048576]{0}', space=vmem, size = 0x100000, scoped, tag = 'output window, operand 1']
    %8 = vsyncpa [#allocation3], 0
    %s9 = scalar_lea.sflag [#allocation3], 1
    %10 = vsyncpa %s9, 0
    %11 = vsyncpa [#allocation4], 0
    %s12 = scalar_lea.sflag [#allocation4], 1
    %13 = vsyncpa %s12, 0
    loop: start=0, step=1, limit=6
    $region2: #{tpu_custom_call.1} parent=1 // loop_pre_header
      _
    $region3: #{tpu_custom_call.1} parent=1 // loop_header
      %s15 = sphi 0, %s19
      %p16 = scmp.ge.s32.totalorder %s15, 6
      %s22 = sphi 0, %s34
      %s23 = sphi 0, %s30
      %s24 = sphi 0, %s22
      %s25 = sphi 0, %s23
      %s26 = sphi 0, %s24
      %s27 = sphi 0, %s25
      %s39 = sphi 0, %s41
      %s42 = sphi 0, %s39
      %s43 = sphi 0, %s42
      %s59 = sphi 0, %s43
      %s65 = sphi 0, %s67
      %s68 = sphi 0, %s65
      %s69 = sphi 0, %s68
      %s85 = sphi 0, %s69
      %s93 = sphi 0, %s95
      %s96 = sphi 0, %s93
      %s97 = sphi 0, %s96
      %s113 = sphi 0, %s97
    $region4: #{tpu_custom_call.1} parent=1 // loop_header_branch
      %18 = sbr.rel (%p16) target = $region8
    $region5: #{tpu_custom_call.1} parent=1 // loop_body
      %s20 = ssub.s32 %s15, 1
      %s21 = ssub.s32 %s15, 2
      %s28 = sadd.s32 1, %s23
      %p29 = scmp.ge.s32.totalorder %s28, 2
      %s30 = scalar_select %p29, 0, %s28
      %s31 = sadd.s32 1, %s22
      %s32 = scalar_select %p29, %s31, %s22
      %p33 = scmp.ge.s32.totalorder %s32, 2
      %s34 = scalar_select %p33, 0, %s32
      %s35 = ssub.s32 %s22, %s34
      %s36 = ssub.s32 %s23, %s30
      %s37 = sor.u32 %s35, %s36
      %p38 = scmp.eq.s32.totalorder %s37, 0
      %s40 = sadd.s32 %s39, 1
      %s41 = scalar_select %p38, %s39, %s40
      %p44 = pneg %p38
      %p45 = scmp.eq.s32.totalorder %s15, 3
      %p46 = por %p44, %p45
      %p47 = scmp.ne.s32.totalorder %s39, %s42
      %p48 = scmp.eq.s32.totalorder %s15, 0
      %p49 = por %p47, %p48
      %p50 = scmp.ne.s32.totalorder %s39, %s42
      %p51 = scmp.eq.s32.totalorder %s20, 3
      %p52 = por %p50, %p51
      %p53 = scmp.ne.s32.totalorder %s42, %s43
      %p54 = scmp.eq.s32.totalorder %s20, 0
      %p55 = por %p53, %p54
      %p56 = scmp.ne.s32.totalorder %s42, %s43
      %p57 = scmp.eq.s32.totalorder %s21, 3
      %p58 = por %p56, %p57
      %p60 = scmp.ne.s32.totalorder %s43, %s59
      %p61 = scmp.eq.s32.totalorder %s21, 0
      %p62 = por %p60, %p61
      %s63 = ssub.s32 %s22, %s34
      %p64 = scmp.eq.s32.totalorder %s63, 0
      %s66 = sadd.s32 %s65, 1
      %s67 = scalar_select %p64, %s65, %s66
      %p70 = pneg %p64
      %p71 = scmp.eq.s32.totalorder %s15, 3
      %p72 = por %p70, %p71
      %p73 = scmp.ne.s32.totalorder %s65, %s68
      %p74 = scmp.eq.s32.totalorder %s15, 0
      %p75 = por %p73, %p74
      %p76 = scmp.ne.s32.totalorder %s65, %s68
      %p77 = scmp.eq.s32.totalorder %s20, 3
      %p78 = por %p76, %p77
      %p79 = scmp.ne.s32.totalorder %s68, %s69
      %p80 = scmp.eq.s32.totalorder %s20, 0
      %p81 = por %p79, %p80
      %p82 = scmp.ne.s32.totalorder %s68, %s69
      %p83 = scmp.eq.s32.totalorder %s21, 3
      %p84 = por %p82, %p83
      %p86 = scmp.ne.s32.totalorder %s69, %s85
      %p87 = scmp.eq.s32.totalorder %s21, 0
      %p88 = por %p86, %p87
      %s89 = ssub.s32 %s22, %s34
      %s90 = ssub.s32 %s23, %s30
      %s91 = sor.u32 %s89, %s90
      %p92 = scmp.eq.s32.totalorder %s91, 0
      %s94 = sadd.s32 %s93, 1
      %s95 = scalar_select %p92, %s93, %s94
      %p98 = pneg %p92
      %p99 = scmp.eq.s32.totalorder %s15, 3
      %p100 = por %p98, %p99
      %p101 = scmp.ne.s32.totalorder %s93, %s96
      %p102 = scmp.eq.s32.totalorder %s15, 0
      %p103 = por %p101, %p102
      %p104 = scmp.ne.s32.totalorder %s93, %s96
      %p105 = scmp.eq.s32.totalorder %s20, 3
      %p106 = por %p104, %p105
      %p107 = scmp.ne.s32.totalorder %s96, %s97
      %p108 = scmp.eq.s32.totalorder %s20, 0
      %p109 = por %p107, %p108
      %p110 = scmp.ne.s32.totalorder %s96, %s97
      %p111 = scmp.eq.s32.totalorder %s21, 3
      %p112 = por %p110, %p111
      %p114 = scmp.ne.s32.totalorder %s97, %s113
      %p115 = scmp.eq.s32.totalorder %s21, 0
      %p116 = por %p114, %p115
      %p117 = scmp.le.s32.totalorder 1, %s15
      %p118 = scmp.lt.s32.totalorder %s15, 5
      %p119 = pnand %p117, %p118
      %p120 = pneg %p119
      // Predicated region
      $region9: #{tpu_custom_call.1} parent=5 // pred_check
        _
      $region10: #{tpu_custom_call.1} parent=5 // pred_check_branch
        %122 = sbr.rel (%p119) target = $region12
      $region11: #{tpu_custom_call.1} parent=5 // pred_region
        %s123 = ssub.s32 %s15, 1
      $region12: #{tpu_custom_call.1} parent=5 // pred_fallthru
        _
      %p124 = scmp.lt.s32.totalorder %s15, 4
      // Predicated region
      $region13: #{tpu_custom_call.1} parent=5 // pred_check
        %p125 = pneg %p124
      $region14: #{tpu_custom_call.1} parent=5 // pred_check_branch
        %127 = sbr.rel (%p125) target = $region16
      $region15: #{tpu_custom_call.1} parent=5 // pred_region
        // Predicated region
        $region17: #{tpu_custom_call.1} parent=15 // pred_check
          %p128 = pneg %p49
        $region18: #{tpu_custom_call.1} parent=15 // pred_check_branch
          %130 = sbr.rel (%p128) target = $region20
        $region19: #{tpu_custom_call.1} parent=15 // pred_region
          %s131 = sand.u32 %s39, 1
          %s132 = scalar_lea.sflag [#allocation3], %s131
          %s133 = sand.u32 %s39, 1
          %s134 = smul.addr %s133, 2048
          %s135 = scalar_lea.vmem [#allocation2], %s134
          %s136 = smul.u32 64, %s22
          %s137 = smul.u32 4, %s23
          %s139 = ssub.s32 32768, 32768
          %140 = vsyncadd %s132, %s139
          %s141 = smul.addr %s136, 8
          %s142 = sadd.s32 %s137, %s141
          %s143 = smul.addr %s142, 128
          %s144 = scalar_lea.hbm %s0, %s143
          %s145 = sshll.u32 %s135, 4
          %s146 = int_to_ptr.vmem [resolvable:$true] %s145
          %151 = dma.hbm_to_vmem [thread:$0]  %s144, 32768, %s146, %s132, 1024, 512, 32
        $region20: #{tpu_custom_call.1} parent=15 // pred_fallthru
          _
      $region16: #{tpu_custom_call.1} parent=5 // pred_fallthru
        _
      %p152 = scmp.le.s32.totalorder 1, %s15
      %p153 = scmp.lt.s32.totalorder %s15, 5
      %p154 = pnand %p152, %p153
      %p155 = pneg %p154
      // Predicated region
      $region21: #{tpu_custom_call.1} parent=5 // pred_check
        _
      $region22: #{tpu_custom_call.1} parent=5 // pred_check_branch
        %157 = sbr.rel (%p154) target = $region24
      $region23: #{tpu_custom_call.1} parent=5 // pred_region
        %s158 = ssub.s32 %s15, 1
        %s159 = sand.u32 %s42, 1
        %s160 = scalar_lea.sflag [#allocation3], %s159
        %s161 = sand.u32 %s42, 1
        %s162 = smul.addr %s161, 2048
        %s163 = scalar_lea.vmem [#allocation2], %s162
        // Predicated region
        $region25: #{tpu_custom_call.1} parent=23 // pred_check
          %p164 = pneg %p55
        $region26: #{tpu_custom_call.1} parent=23 // pred_check_branch
          %166 = sbr.rel (%p164) target = $region28
        $region27: #{tpu_custom_call.1} parent=23 // pred_region
          %167 = dma.done %s160, 32768
        $region28: #{tpu_custom_call.1} parent=23 // pred_fallthru
          _
        %s168 = sand.u32 %s42, 1
        %s169 = scalar_lea.sflag [#allocation3], %s168
        %s170 = sand.u32 %s42, 1
        %s171 = smul.addr %s170, 2048
        %s172 = scalar_lea.vmem [#allocation2], %s171
        %p173 = pneg %p55
        %p174 = pneg %p52
        %p175 = pneg %p81
        %p176 = pneg %p78
        %s177 = smul.u32 64, %s24
        %p178 = scmp.lt.s32.totalorder %s177, 127
        %s179 = scalar_select %p178, %s177, 127
        %s180 = smul.addr %s179, 8
        %s181 = scalar_lea.vmem %s1, %s180
        %p182 = pneg %p109
        %p183 = pneg %p106
        %s184 = sand.u32 %s96, 1
        %s185 = scalar_lea.sflag [#allocation4], %s184
        %s186 = sand.u32 %s96, 1
        %s187 = smul.addr %s186, 1024
        %s188 = scalar_lea.vmem [#allocation5], %s187
        %s189 = smul.u32 64, %s24
        %s190 = smul.u32 4, %s25
        %s191 = smul.u32 64, %s24
        %p192 = scmp.lt.s32.totalorder %s191, 127
        %s193 = scalar_select %p192, %s191, 127
        %s194 = smul.addr %s193, 8
        %s195 = scalar_lea.vmem %s1, %s194
        %s196 = smul.u32 64, %s24
        %s197 = smul.u32 64, %s24
        %s198 = smul.u32 4, %s25
        %v199 = vld [vmem:[%s163] sm:$0xff]
        %v200 = vld [vmem:[%s163 + $0x8] sm:$0xff]
        %v201 = vld [vmem:[%s163 + $0x10] sm:$0xff]
        %v202 = vld [vmem:[%s163 + $0x18] sm:$0xff]
        %v203 = vld [vmem:[%s163 + $0x20] sm:$0xff]
        %v204 = vld [vmem:[%s163 + $0x28] sm:$0xff]
        %v205 = vld [vmem:[%s163 + $0x30] sm:$0xff]
        %v206 = vld [vmem:[%s163 + $0x38] sm:$0xff]
        %v207 = vld [vmem:[%s163 + $0x40] sm:$0xff]
        %v208 = vld [vmem:[%s163 + $0x48] sm:$0xff]
        %v209 = vld [vmem:[%s163 + $0x50] sm:$0xff]
        %v210 = vld [vmem:[%s163 + $0x58] sm:$0xff]
        %v211 = vld [vmem:[%s163 + $0x60] sm:$0xff]
        %v212 = vld [vmem:[%s163 + $0x68] sm:$0xff]
        %v213 = vld [vmem:[%s163 + $0x70] sm:$0xff]
        %v214 = vld [vmem:[%s163 + $0x78] sm:$0xff]
        %v215 = vld [vmem:[%s163 + $0x80] sm:$0xff]
        %v216 = vld [vmem:[%s163 + $0x88] sm:$0xff]
        %v217 = vld [vmem:[%s163 + $0x90] sm:$0xff]
        %v218 = vld [vmem:[%s163 + $0x98] sm:$0xff]
        %v219 = vld [vmem:[%s163 + $0xa0] sm:$0xff]
        %v220 = vld [vmem:[%s163 + $0xa8] sm:$0xff]
        %v221 = vld [vmem:[%s163 + $0xb0] sm:$0xff]
        %v222 = vld [vmem:[%s163 + $0xb8] sm:$0xff]
        %v223 = vld [vmem:[%s163 + $0xc0] sm:$0xff]
        %v224 = vld [vmem:[%s163 + $0xc8] sm:$0xff]
        %v225 = vld [vmem:[%s163 + $0xd0] sm:$0xff]
        %v226 = vld [vmem:[%s163 + $0xd8] sm:$0xff]
        %v227 = vld [vmem:[%s163 + $0xe0] sm:$0xff]
        %v228 = vld [vmem:[%s163 + $0xe8] sm:$0xff]
        %v229 = vld [vmem:[%s163 + $0xf0] sm:$0xff]
        %v230 = vld [vmem:[%s163 + $0xf8] sm:$0xff]
        %v231 = vld [vmem:[%s163 + $0x100] sm:$0xff]
        %v232 = vld [vmem:[%s163 + $0x108] sm:$0xff]
        %v233 = vld [vmem:[%s163 + $0x110] sm:$0xff]
        %v234 = vld [vmem:[%s163 + $0x118] sm:$0xff]
        %v235 = vld [vmem:[%s163 + $0x120] sm:$0xff]
        %v236 = vld [vmem:[%s163 + $0x128] sm:$0xff]
        %v237 = vld [vmem:[%s163 + $0x130] sm:$0xff]
        %v238 = vld [vmem:[%s163 + $0x138] sm:$0xff]
        %v239 = vld [vmem:[%s163 + $0x140] sm:$0xff]
        %v240 = vld [vmem:[%s163 + $0x148] sm:$0xff]
        %v241 = vld [vmem:[%s163 + $0x150] sm:$0xff]
        %v242 = vld [vmem:[%s163 + $0x158] sm:$0xff]
        %v243 = vld [vmem:[%s163 + $0x160] sm:$0xff]
        %v244 = vld [vmem:[%s163 + $0x168] sm:$0xff]
        %v245 = vld [vmem:[%s163 + $0x170] sm:$0xff]
        %v246 = vld [vmem:[%s163 + $0x178] sm:$0xff]
        %v247 = vld [vmem:[%s163 + $0x180] sm:$0xff]
        %v248 = vld [vmem:[%s163 + $0x188] sm:$0xff]
        %v249 = vld [vmem:[%s163 + $0x190] sm:$0xff]
        %v250 = vld [vmem:[%s163 + $0x198] sm:$0xff]
        %v251 = vld [vmem:[%s163 + $0x1a0] sm:$0xff]
        %v252 = vld [vmem:[%s163 + $0x1a8] sm:$0xff]
        %v253 = vld [vmem:[%s163 + $0x1b0] sm:$0xff]
        %v254 = vld [vmem:[%s163 + $0x1b8] sm:$0xff]
        %v255 = vld [vmem:[%s163 + $0x1c0] sm:$0xff]
        %v256 = vld [vmem:[%s163 + $0x1c8] sm:$0xff]
        %v257 = vld [vmem:[%s163 + $0x1d0] sm:$0xff]
        %v258 = vld [vmem:[%s163 + $0x1d8] sm:$0xff]
        %v259 = vld [vmem:[%s163 + $0x1e0] sm:$0xff]
        %v260 = vld [vmem:[%s163 + $0x1e8] sm:$0xff]
        %v261 = vld [vmem:[%s163 + $0x1f0] sm:$0xff]
        %v262 = vld [vmem:[%s163 + $0x1f8] sm:$0xff]
        %v263 = vld [vmem:[%s163 + $0x200] sm:$0xff]
        %v264 = vld [vmem:[%s163 + $0x208] sm:$0xff]
        %v265 = vld [vmem:[%s163 + $0x210] sm:$0xff]
        %v266 = vld [vmem:[%s163 + $0x218] sm:$0xff]
        %v267 = vld [vmem:[%s163 + $0x220] sm:$0xff]
        %v268 = vld [vmem:[%s163 + $0x228] sm:$0xff]
        %v269 = vld [vmem:[%s163 + $0x230] sm:$0xff]
        %v270 = vld [vmem:[%s163 + $0x238] sm:$0xff]
        %v271 = vld [vmem:[%s163 + $0x240] sm:$0xff]
        %v272 = vld [vmem:[%s163 + $0x248] sm:$0xff]
        %v273 = vld [vmem:[%s163 + $0x250] sm:$0xff]
        %v274 = vld [vmem:[%s163 + $0x258] sm:$0xff]
        %v275 = vld [vmem:[%s163 + $0x260] sm:$0xff]
        %v276 = vld [vmem:[%s163 + $0x268] sm:$0xff]
        %v277 = vld [vmem:[%s163 + $0x270] sm:$0xff]
        %v278 = vld [vmem:[%s163 + $0x278] sm:$0xff]
        %v279 = vld [vmem:[%s163 + $0x280] sm:$0xff]
        %v280 = vld [vmem:[%s163 + $0x288] sm:$0xff]
        %v281 = vld [vmem:[%s163 + $0x290] sm:$0xff]
        %v282 = vld [vmem:[%s163 + $0x298] sm:$0xff]
        %v283 = vld [vmem:[%s163 + $0x2a0] sm:$0xff]
        %v284 = vld [vmem:[%s163 + $0x2a8] sm:$0xff]
        %v285 = vld [vmem:[%s163 + $0x2b0] sm:$0xff]
        %v286 = vld [vmem:[%s163 + $0x2b8] sm:$0xff]
        %v287 = vld [vmem:[%s163 + $0x2c0] sm:$0xff]
        %v288 = vld [vmem:[%s163 + $0x2c8] sm:$0xff]
        %v289 = vld [vmem:[%s163 + $0x2d0] sm:$0xff]
        %v290 = vld [vmem:[%s163 + $0x2d8] sm:$0xff]
        %v291 = vld [vmem:[%s163 + $0x2e0] sm:$0xff]
        %v292 = vld [vmem:[%s163 + $0x2e8] sm:$0xff]
        %v293 = vld [vmem:[%s163 + $0x2f0] sm:$0xff]
        %v294 = vld [vmem:[%s163 + $0x2f8] sm:$0xff]
        %v295 = vld [vmem:[%s163 + $0x300] sm:$0xff]
        %v296 = vld [vmem:[%s163 + $0x308] sm:$0xff]
        %v297 = vld [vmem:[%s163 + $0x310] sm:$0xff]
        %v298 = vld [vmem:[%s163 + $0x318] sm:$0xff]
        %v299 = vld [vmem:[%s163 + $0x320] sm:$0xff]
        %v300 = vld [vmem:[%s163 + $0x328] sm:$0xff]
        %v301 = vld [vmem:[%s163 + $0x330] sm:$0xff]
        %v302 = vld [vmem:[%s163 + $0x338] sm:$0xff]
        %v303 = vld [vmem:[%s163 + $0x340] sm:$0xff]
        %v304 = vld [vmem:[%s163 + $0x348] sm:$0xff]
        %v305 = vld [vmem:[%s163 + $0x350] sm:$0xff]
        %v306 = vld [vmem:[%s163 + $0x358] sm:$0xff]
        %v307 = vld [vmem:[%s163 + $0x360] sm:$0xff]
        %v308 = vld [vmem:[%s163 + $0x368] sm:$0xff]
        %v309 = vld [vmem:[%s163 + $0x370] sm:$0xff]
        %v310 = vld [vmem:[%s163 + $0x378] sm:$0xff]
        %v311 = vld [vmem:[%s163 + $0x380] sm:$0xff]
        %v312 = vld [vmem:[%s163 + $0x388] sm:$0xff]
        %v313 = vld [vmem:[%s163 + $0x390] sm:$0xff]
        %v314 = vld [vmem:[%s163 + $0x398] sm:$0xff]
        %v315 = vld [vmem:[%s163 + $0x3a0] sm:$0xff]
        %v316 = vld [vmem:[%s163 + $0x3a8] sm:$0xff]
        %v317 = vld [vmem:[%s163 + $0x3b0] sm:$0xff]
        %v318 = vld [vmem:[%s163 + $0x3b8] sm:$0xff]
        %v319 = vld [vmem:[%s163 + $0x3c0] sm:$0xff]
        %v320 = vld [vmem:[%s163 + $0x3c8] sm:$0xff]
        %v321 = vld [vmem:[%s163 + $0x3d0] sm:$0xff]
        %v322 = vld [vmem:[%s163 + $0x3d8] sm:$0xff]
        %v323 = vld [vmem:[%s163 + $0x3e0] sm:$0xff]
        %v324 = vld [vmem:[%s163 + $0x3e8] sm:$0xff]
        %v325 = vld [vmem:[%s163 + $0x3f0] sm:$0xff]
        %v326 = vld [vmem:[%s163 + $0x3f8] sm:$0xff]
        %v327 = vld [vmem:[%s163 + $0x400] sm:$0xff]
        %v328 = vld [vmem:[%s163 + $0x408] sm:$0xff]
        %v329 = vld [vmem:[%s163 + $0x410] sm:$0xff]
        %v330 = vld [vmem:[%s163 + $0x418] sm:$0xff]
        %v331 = vld [vmem:[%s163 + $0x420] sm:$0xff]
        %v332 = vld [vmem:[%s163 + $0x428] sm:$0xff]
        %v333 = vld [vmem:[%s163 + $0x430] sm:$0xff]
        %v334 = vld [vmem:[%s163 + $0x438] sm:$0xff]
        %v335 = vld [vmem:[%s163 + $0x440] sm:$0xff]
        %v336 = vld [vmem:[%s163 + $0x448] sm:$0xff]
        %v337 = vld [vmem:[%s163 + $0x450] sm:$0xff]
        %v338 = vld [vmem:[%s163 + $0x458] sm:$0xff]
        %v339 = vld [vmem:[%s163 + $0x460] sm:$0xff]
        %v340 = vld [vmem:[%s163 + $0x468] sm:$0xff]
        %v341 = vld [vmem:[%s163 + $0x470] sm:$0xff]
        %v342 = vld [vmem:[%s163 + $0x478] sm:$0xff]
        %v343 = vld [vmem:[%s163 + $0x480] sm:$0xff]
        %v344 = vld [vmem:[%s163 + $0x488] sm:$0xff]
        %v345 = vld [vmem:[%s163 + $0x490] sm:$0xff]
        %v346 = vld [vmem:[%s163 + $0x498] sm:$0xff]
        %v347 = vld [vmem:[%s163 + $0x4a0] sm:$0xff]
        %v348 = vld [vmem:[%s163 + $0x4a8] sm:$0xff]
        %v349 = vld [vmem:[%s163 + $0x4b0] sm:$0xff]
        %v350 = vld [vmem:[%s163 + $0x4b8] sm:$0xff]
        %v351 = vld [vmem:[%s163 + $0x4c0] sm:$0xff]
        %v352 = vld [vmem:[%s163 + $0x4c8] sm:$0xff]
        %v353 = vld [vmem:[%s163 + $0x4d0] sm:$0xff]
        %v354 = vld [vmem:[%s163 + $0x4d8] sm:$0xff]
        %v355 = vld [vmem:[%s163 + $0x4e0] sm:$0xff]
        %v356 = vld [vmem:[%s163 + $0x4e8] sm:$0xff]
        %v357 = vld [vmem:[%s163 + $0x4f0] sm:$0xff]
        %v358 = vld [vmem:[%s163 + $0x4f8] sm:$0xff]
        %v359 = vld [vmem:[%s163 + $0x500] sm:$0xff]
        %v360 = vld [vmem:[%s163 + $0x508] sm:$0xff]
        %v361 = vld [vmem:[%s163 + $0x510] sm:$0xff]
        %v362 = vld [vmem:[%s163 + $0x518] sm:$0xff]
        %v363 = vld [vmem:[%s163 + $0x520] sm:$0xff]
        %v364 = vld [vmem:[%s163 + $0x528] sm:$0xff]
        %v365 = vld [vmem:[%s163 + $0x530] sm:$0xff]
        %v366 = vld [vmem:[%s163 + $0x538] sm:$0xff]
        %v367 = vld [vmem:[%s163 + $0x540] sm:$0xff]
        %v368 = vld [vmem:[%s163 + $0x548] sm:$0xff]
        %v369 = vld [vmem:[%s163 + $0x550] sm:$0xff]
        %v370 = vld [vmem:[%s163 + $0x558] sm:$0xff]
        %v371 = vld [vmem:[%s163 + $0x560] sm:$0xff]
        %v372 = vld [vmem:[%s163 + $0x568] sm:$0xff]
        %v373 = vld [vmem:[%s163 + $0x570] sm:$0xff]
        %v374 = vld [vmem:[%s163 + $0x578] sm:$0xff]
        %v375 = vld [vmem:[%s163 + $0x580] sm:$0xff]
        %v376 = vld [vmem:[%s163 + $0x588] sm:$0xff]
        %v377 = vld [vmem:[%s163 + $0x590] sm:$0xff]
        %v378 = vld [vmem:[%s163 + $0x598] sm:$0xff]
        %v379 = vld [vmem:[%s163 + $0x5a0] sm:$0xff]
        %v380 = vld [vmem:[%s163 + $0x5a8] sm:$0xff]
        %v381 = vld [vmem:[%s163 + $0x5b0] sm:$0xff]
        %v382 = vld [vmem:[%s163 + $0x5b8] sm:$0xff]
        %v383 = vld [vmem:[%s163 + $0x5c0] sm:$0xff]
        %v384 = vld [vmem:[%s163 + $0x5c8] sm:$0xff]
        %v385 = vld [vmem:[%s163 + $0x5d0] sm:$0xff]
        %v386 = vld [vmem:[%s163 + $0x5d8] sm:$0xff]
        %v387 = vld [vmem:[%s163 + $0x5e0] sm:$0xff]
        %v388 = vld [vmem:[%s163 + $0x5e8] sm:$0xff]
        %v389 = vld [vmem:[%s163 + $0x5f0] sm:$0xff]
        %v390 = vld [vmem:[%s163 + $0x5f8] sm:$0xff]
        %v391 = vld [vmem:[%s163 + $0x600] sm:$0xff]
        %v392 = vld [vmem:[%s163 + $0x608] sm:$0xff]
        %v393 = vld [vmem:[%s163 + $0x610] sm:$0xff]
        %v394 = vld [vmem:[%s163 + $0x618] sm:$0xff]
        %v395 = vld [vmem:[%s163 + $0x620] sm:$0xff]
        %v396 = vld [vmem:[%s163 + $0x628] sm:$0xff]
        %v397 = vld [vmem:[%s163 + $0x630] sm:$0xff]
        %v398 = vld [vmem:[%s163 + $0x638] sm:$0xff]
        %v399 = vld [vmem:[%s163 + $0x640] sm:$0xff]
        %v400 = vld [vmem:[%s163 + $0x648] sm:$0xff]
        %v401 = vld [vmem:[%s163 + $0x650] sm:$0xff]
        %v402 = vld [vmem:[%s163 + $0x658] sm:$0xff]
        %v403 = vld [vmem:[%s163 + $0x660] sm:$0xff]
        %v404 = vld [vmem:[%s163 + $0x668] sm:$0xff]
        %v405 = vld [vmem:[%s163 + $0x670] sm:$0xff]
        %v406 = vld [vmem:[%s163 + $0x678] sm:$0xff]
        %v407 = vld [vmem:[%s163 + $0x680] sm:$0xff]
        %v408 = vld [vmem:[%s163 + $0x688] sm:$0xff]
        %v409 = vld [vmem:[%s163 + $0x690] sm:$0xff]
        %v410 = vld [vmem:[%s163 + $0x698] sm:$0xff]
        %v411 = vld [vmem:[%s163 + $0x6a0] sm:$0xff]
        %v412 = vld [vmem:[%s163 + $0x6a8] sm:$0xff]
        %v413 = vld [vmem:[%s163 + $0x6b0] sm:$0xff]
        %v414 = vld [vmem:[%s163 + $0x6b8] sm:$0xff]
        %v415 = vld [vmem:[%s163 + $0x6c0] sm:$0xff]
        %v416 = vld [vmem:[%s163 + $0x6c8] sm:$0xff]
        %v417 = vld [vmem:[%s163 + $0x6d0] sm:$0xff]
        %v418 = vld [vmem:[%s163 + $0x6d8] sm:$0xff]
        %v419 = vld [vmem:[%s163 + $0x6e0] sm:$0xff]
        %v420 = vld [vmem:[%s163 + $0x6e8] sm:$0xff]
        %v421 = vld [vmem:[%s163 + $0x6f0] sm:$0xff]
        %v422 = vld [vmem:[%s163 + $0x6f8] sm:$0xff]
        %v423 = vld [vmem:[%s163 + $0x700] sm:$0xff]
        %v424 = vld [vmem:[%s163 + $0x708] sm:$0xff]
        %v425 = vld [vmem:[%s163 + $0x710] sm:$0xff]
        %v426 = vld [vmem:[%s163 + $0x718] sm:$0xff]
        %v427 = vld [vmem:[%s163 + $0x720] sm:$0xff]
        %v428 = vld [vmem:[%s163 + $0x728] sm:$0xff]
        %v429 = vld [vmem:[%s163 + $0x730] sm:$0xff]
        %v430 = vld [vmem:[%s163 + $0x738] sm:$0xff]
        %v431 = vld [vmem:[%s163 + $0x740] sm:$0xff]
        %v432 = vld [vmem:[%s163 + $0x748] sm:$0xff]
        %v433 = vld [vmem:[%s163 + $0x750] sm:$0xff]
        %v434 = vld [vmem:[%s163 + $0x758] sm:$0xff]
        %v435 = vld [vmem:[%s163 + $0x760] sm:$0xff]
        %v436 = vld [vmem:[%s163 + $0x768] sm:$0xff]
        %v437 = vld [vmem:[%s163 + $0x770] sm:$0xff]
        %v438 = vld [vmem:[%s163 + $0x778] sm:$0xff]
        %v439 = vld [vmem:[%s163 + $0x780] sm:$0xff]
        %v440 = vld [vmem:[%s163 + $0x788] sm:$0xff]
        %v441 = vld [vmem:[%s163 + $0x790] sm:$0xff]
        %v442 = vld [vmem:[%s163 + $0x798] sm:$0xff]
        %v443 = vld [vmem:[%s163 + $0x7a0] sm:$0xff]
        %v444 = vld [vmem:[%s163 + $0x7a8] sm:$0xff]
        %v445 = vld [vmem:[%s163 + $0x7b0] sm:$0xff]
        %v446 = vld [vmem:[%s163 + $0x7b8] sm:$0xff]
        %v447 = vld [vmem:[%s163 + $0x7c0] sm:$0xff]
        %v448 = vld [vmem:[%s163 + $0x7c8] sm:$0xff]
        %v449 = vld [vmem:[%s163 + $0x7d0] sm:$0xff]
        %v450 = vld [vmem:[%s163 + $0x7d8] sm:$0xff]
        %v451 = vld [vmem:[%s163 + $0x7e0] sm:$0xff]
        %v452 = vld [vmem:[%s163 + $0x7e8] sm:$0xff]
        %v453 = vld [vmem:[%s163 + $0x7f0] sm:$0xff]
        %v454 = vld [vmem:[%s163 + $0x7f8] sm:$0xff]
        %v455 = vpack.c.bf16 %v203, %v199
        %v456 = vpack.c.bf16 %v204, %v200
        %v457 = vpack.c.bf16 %v205, %v201
        %v458 = vpack.c.bf16 %v206, %v202
        %v459 = vpack.c.bf16 %v211, %v207
        %v460 = vpack.c.bf16 %v212, %v208
        %v461 = vpack.c.bf16 %v213, %v209
        %v462 = vpack.c.bf16 %v214, %v210
        %v463 = vpack.c.bf16 %v219, %v215
        %v464 = vpack.c.bf16 %v220, %v216
        %v465 = vpack.c.bf16 %v221, %v217
        %v466 = vpack.c.bf16 %v222, %v218
        %v467 = vpack.c.bf16 %v227, %v223
        %v468 = vpack.c.bf16 %v228, %v224
        %v469 = vpack.c.bf16 %v229, %v225
        %v470 = vpack.c.bf16 %v230, %v226
        %v471 = vpack.c.bf16 %v235, %v231
        %v472 = vpack.c.bf16 %v236, %v232
        %v473 = vpack.c.bf16 %v237, %v233
        %v474 = vpack.c.bf16 %v238, %v234
        %v475 = vpack.c.bf16 %v243, %v239
        %v476 = vpack.c.bf16 %v244, %v240
        %v477 = vpack.c.bf16 %v245, %v241
        %v478 = vpack.c.bf16 %v246, %v242
        %v479 = vpack.c.bf16 %v251, %v247
        %v480 = vpack.c.bf16 %v252, %v248
        %v481 = vpack.c.bf16 %v253, %v249
        %v482 = vpack.c.bf16 %v254, %v250
        %v483 = vpack.c.bf16 %v259, %v255
        %v484 = vpack.c.bf16 %v260, %v256
        %v485 = vpack.c.bf16 %v261, %v257
        %v486 = vpack.c.bf16 %v262, %v258
        %v487 = vpack.c.bf16 %v267, %v263
        %v488 = vpack.c.bf16 %v268, %v264
        %v489 = vpack.c.bf16 %v269, %v265
        %v490 = vpack.c.bf16 %v270, %v266
        %v491 = vpack.c.bf16 %v275, %v271
        %v492 = vpack.c.bf16 %v276, %v272
        %v493 = vpack.c.bf16 %v277, %v273
        %v494 = vpack.c.bf16 %v278, %v274
        %v495 = vpack.c.bf16 %v283, %v279
        %v496 = vpack.c.bf16 %v284, %v280
        %v497 = vpack.c.bf16 %v285, %v281
        %v498 = vpack.c.bf16 %v286, %v282
        %v499 = vpack.c.bf16 %v291, %v287
        %v500 = vpack.c.bf16 %v292, %v288
        %v501 = vpack.c.bf16 %v293, %v289
        %v502 = vpack.c.bf16 %v294, %v290
        %v503 = vpack.c.bf16 %v299, %v295
        %v504 = vpack.c.bf16 %v300, %v296
        %v505 = vpack.c.bf16 %v301, %v297
        %v506 = vpack.c.bf16 %v302, %v298
        %v507 = vpack.c.bf16 %v307, %v303
        %v508 = vpack.c.bf16 %v308, %v304
        %v509 = vpack.c.bf16 %v309, %v305
        %v510 = vpack.c.bf16 %v310, %v306
        %v511 = vpack.c.bf16 %v315, %v311
        %v512 = vpack.c.bf16 %v316, %v312
        %v513 = vpack.c.bf16 %v317, %v313
        %v514 = vpack.c.bf16 %v318, %v314
        %v515 = vpack.c.bf16 %v323, %v319
        %v516 = vpack.c.bf16 %v324, %v320
        %v517 = vpack.c.bf16 %v325, %v321
        %v518 = vpack.c.bf16 %v326, %v322
        %v519 = vpack.c.bf16 %v331, %v327
        %v520 = vpack.c.bf16 %v332, %v328
        %v521 = vpack.c.bf16 %v333, %v329
        %v522 = vpack.c.bf16 %v334, %v330
        %v523 = vpack.c.bf16 %v339, %v335
        %v524 = vpack.c.bf16 %v340, %v336
        %v525 = vpack.c.bf16 %v341, %v337
        %v526 = vpack.c.bf16 %v342, %v338
        %v527 = vpack.c.bf16 %v347, %v343
        %v528 = vpack.c.bf16 %v348, %v344
        %v529 = vpack.c.bf16 %v349, %v345
        %v530 = vpack.c.bf16 %v350, %v346
        %v531 = vpack.c.bf16 %v355, %v351
        %v532 = vpack.c.bf16 %v356, %v352
        %v533 = vpack.c.bf16 %v357, %v353
        %v534 = vpack.c.bf16 %v358, %v354
        %v535 = vpack.c.bf16 %v363, %v359
        %v536 = vpack.c.bf16 %v364, %v360
        %v537 = vpack.c.bf16 %v365, %v361
        %v538 = vpack.c.bf16 %v366, %v362
        %v539 = vpack.c.bf16 %v371, %v367
        %v540 = vpack.c.bf16 %v372, %v368
        %v541 = vpack.c.bf16 %v373, %v369
        %v542 = vpack.c.bf16 %v374, %v370
        %v543 = vpack.c.bf16 %v379, %v375
        %v544 = vpack.c.bf16 %v380, %v376
        %v545 = vpack.c.bf16 %v381, %v377
        %v546 = vpack.c.bf16 %v382, %v378
        %v547 = vpack.c.bf16 %v387, %v383
        %v548 = vpack.c.bf16 %v388, %v384
        %v549 = vpack.c.bf16 %v389, %v385
        %v550 = vpack.c.bf16 %v390, %v386
        %v551 = vpack.c.bf16 %v395, %v391
        %v552 = vpack.c.bf16 %v396, %v392
        %v553 = vpack.c.bf16 %v397, %v393
        %v554 = vpack.c.bf16 %v398, %v394
        %v555 = vpack.c.bf16 %v403, %v399
        %v556 = vpack.c.bf16 %v404, %v400
        %v557 = vpack.c.bf16 %v405, %v401
        %v558 = vpack.c.bf16 %v406, %v402
        %v559 = vpack.c.bf16 %v411, %v407
        %v560 = vpack.c.bf16 %v412, %v408
        %v561 = vpack.c.bf16 %v413, %v409
        %v562 = vpack.c.bf16 %v414, %v410
        %v563 = vpack.c.bf16 %v419, %v415
        %v564 = vpack.c.bf16 %v420, %v416
        %v565 = vpack.c.bf16 %v421, %v417
        %v566 = vpack.c.bf16 %v422, %v418
        %v567 = vpack.c.bf16 %v427, %v423
        %v568 = vpack.c.bf16 %v428, %v424
        %v569 = vpack.c.bf16 %v429, %v425
        %v570 = vpack.c.bf16 %v430, %v426
        %v571 = vpack.c.bf16 %v435, %v431
        %v572 = vpack.c.bf16 %v436, %v432
        %v573 = vpack.c.bf16 %v437, %v433
        %v574 = vpack.c.bf16 %v438, %v434
        %v575 = vpack.c.bf16 %v443, %v439
        %v576 = vpack.c.bf16 %v444, %v440
        %v577 = vpack.c.bf16 %v445, %v441
        %v578 = vpack.c.bf16 %v446, %v442
        %v579 = vpack.c.bf16 %v451, %v447
        %v580 = vpack.c.bf16 %v452, %v448
        %v581 = vpack.c.bf16 %v453, %v449
        %v582 = vpack.c.bf16 %v454, %v450
        %v711 = vunpack.c.l.b16 %v455
        %v712 = vunpack.c.l.b16 %v456
        %v713 = vunpack.c.l.b16 %v457
        %v714 = vunpack.c.l.b16 %v458
        %v715 = vunpack.c.h.b16 %v455
        %v716 = vunpack.c.h.b16 %v456
        %v717 = vunpack.c.h.b16 %v457
        %v718 = vunpack.c.h.b16 %v458
        %v719 = vunpack.c.l.b16 %v459
        %v720 = vunpack.c.l.b16 %v460
        %v721 = vunpack.c.l.b16 %v461
        %v722 = vunpack.c.l.b16 %v462
        %v723 = vunpack.c.h.b16 %v459
        %v724 = vunpack.c.h.b16 %v460
        %v725 = vunpack.c.h.b16 %v461
        %v726 = vunpack.c.h.b16 %v462
        %v727 = vunpack.c.l.b16 %v463
        %v728 = vunpack.c.l.b16 %v464
        %v729 = vunpack.c.l.b16 %v465
        %v730 = vunpack.c.l.b16 %v466
        %v731 = vunpack.c.h.b16 %v463
        %v732 = vunpack.c.h.b16 %v464
        %v733 = vunpack.c.h.b16 %v465
        %v734 = vunpack.c.h.b16 %v466
        %v735 = vunpack.c.l.b16 %v467
        %v736 = vunpack.c.l.b16 %v468
        %v737 = vunpack.c.l.b16 %v469
        %v738 = vunpack.c.l.b16 %v470
        %v739 = vunpack.c.h.b16 %v467
        %v740 = vunpack.c.h.b16 %v468
        %v741 = vunpack.c.h.b16 %v469
        %v742 = vunpack.c.h.b16 %v470
        %v743 = vunpack.c.l.b16 %v471
        %v744 = vunpack.c.l.b16 %v472
        %v745 = vunpack.c.l.b16 %v473
        %v746 = vunpack.c.l.b16 %v474
        %v747 = vunpack.c.h.b16 %v471
        %v748 = vunpack.c.h.b16 %v472
        %v749 = vunpack.c.h.b16 %v473
        %v750 = vunpack.c.h.b16 %v474
        %v751 = vunpack.c.l.b16 %v475
        %v752 = vunpack.c.l.b16 %v476
        %v753 = vunpack.c.l.b16 %v477
        %v754 = vunpack.c.l.b16 %v478
        %v755 = vunpack.c.h.b16 %v475
        %v756 = vunpack.c.h.b16 %v476
        %v757 = vunpack.c.h.b16 %v477
        %v758 = vunpack.c.h.b16 %v478
        %v759 = vunpack.c.l.b16 %v479
        %v760 = vunpack.c.l.b16 %v480
        %v761 = vunpack.c.l.b16 %v481
        %v762 = vunpack.c.l.b16 %v482
        %v763 = vunpack.c.h.b16 %v479
        %v764 = vunpack.c.h.b16 %v480
        %v765 = vunpack.c.h.b16 %v481
        %v766 = vunpack.c.h.b16 %v482
        %v767 = vunpack.c.l.b16 %v483
        %v768 = vunpack.c.l.b16 %v484
        %v769 = vunpack.c.l.b16 %v485
        %v770 = vunpack.c.l.b16 %v486
        %v771 = vunpack.c.h.b16 %v483
        %v772 = vunpack.c.h.b16 %v484
        %v773 = vunpack.c.h.b16 %v485
        %v774 = vunpack.c.h.b16 %v486
        %v775 = vunpack.c.l.b16 %v487
        %v776 = vunpack.c.l.b16 %v488
        %v777 = vunpack.c.l.b16 %v489
        %v778 = vunpack.c.l.b16 %v490
        %v779 = vunpack.c.h.b16 %v487
        %v780 = vunpack.c.h.b16 %v488
        %v781 = vunpack.c.h.b16 %v489
        %v782 = vunpack.c.h.b16 %v490
        %v783 = vunpack.c.l.b16 %v491
        %v784 = vunpack.c.l.b16 %v492
        %v785 = vunpack.c.l.b16 %v493
        %v786 = vunpack.c.l.b16 %v494
        %v787 = vunpack.c.h.b16 %v491
        %v788 = vunpack.c.h.b16 %v492
        %v789 = vunpack.c.h.b16 %v493
        %v790 = vunpack.c.h.b16 %v494
        %v791 = vunpack.c.l.b16 %v495
        %v792 = vunpack.c.l.b16 %v496
        %v793 = vunpack.c.l.b16 %v497
        %v794 = vunpack.c.l.b16 %v498
        %v795 = vunpack.c.h.b16 %v495
        %v796 = vunpack.c.h.b16 %v496
        %v797 = vunpack.c.h.b16 %v497
        %v798 = vunpack.c.h.b16 %v498
        %v799 = vunpack.c.l.b16 %v499
        %v800 = vunpack.c.l.b16 %v500
        %v801 = vunpack.c.l.b16 %v501
        %v802 = vunpack.c.l.b16 %v502
        %v803 = vunpack.c.h.b16 %v499
        %v804 = vunpack.c.h.b16 %v500
        %v805 = vunpack.c.h.b16 %v501
        %v806 = vunpack.c.h.b16 %v502
        %v807 = vunpack.c.l.b16 %v503
        %v808 = vunpack.c.l.b16 %v504
        %v809 = vunpack.c.l.b16 %v505
        %v810 = vunpack.c.l.b16 %v506
        %v811 = vunpack.c.h.b16 %v503
        %v812 = vunpack.c.h.b16 %v504
        %v813 = vunpack.c.h.b16 %v505
        %v814 = vunpack.c.h.b16 %v506
        %v815 = vunpack.c.l.b16 %v507
        %v816 = vunpack.c.l.b16 %v508
        %v817 = vunpack.c.l.b16 %v509
        %v818 = vunpack.c.l.b16 %v510
        %v819 = vunpack.c.h.b16 %v507
        %v820 = vunpack.c.h.b16 %v508
        %v821 = vunpack.c.h.b16 %v509
        %v822 = vunpack.c.h.b16 %v510
        %v823 = vunpack.c.l.b16 %v511
        %v824 = vunpack.c.l.b16 %v512
        %v825 = vunpack.c.l.b16 %v513
        %v826 = vunpack.c.l.b16 %v514
        %v827 = vunpack.c.h.b16 %v511
        %v828 = vunpack.c.h.b16 %v512
        %v829 = vunpack.c.h.b16 %v513
        %v830 = vunpack.c.h.b16 %v514
        %v831 = vunpack.c.l.b16 %v515
        %v832 = vunpack.c.l.b16 %v516
        %v833 = vunpack.c.l.b16 %v517
        %v834 = vunpack.c.l.b16 %v518
        %v835 = vunpack.c.h.b16 %v515
        %v836 = vunpack.c.h.b16 %v516
        %v837 = vunpack.c.h.b16 %v517
        %v838 = vunpack.c.h.b16 %v518
        %v839 = vunpack.c.l.b16 %v519
        %v840 = vunpack.c.l.b16 %v520
        %v841 = vunpack.c.l.b16 %v521
        %v842 = vunpack.c.l.b16 %v522
        %v843 = vunpack.c.h.b16 %v519
        %v844 = vunpack.c.h.b16 %v520
        %v845 = vunpack.c.h.b16 %v521
        %v846 = vunpack.c.h.b16 %v522
        %v847 = vunpack.c.l.b16 %v523
        %v848 = vunpack.c.l.b16 %v524
        %v849 = vunpack.c.l.b16 %v525
        %v850 = vunpack.c.l.b16 %v526
        %v851 = vunpack.c.h.b16 %v523
        %v852 = vunpack.c.h.b16 %v524
        %v853 = vunpack.c.h.b16 %v525
        %v854 = vunpack.c.h.b16 %v526
        %v855 = vunpack.c.l.b16 %v527
        %v856 = vunpack.c.l.b16 %v528
        %v857 = vunpack.c.l.b16 %v529
        %v858 = vunpack.c.l.b16 %v530
        %v859 = vunpack.c.h.b16 %v527
        %v860 = vunpack.c.h.b16 %v528
        %v861 = vunpack.c.h.b16 %v529
        %v862 = vunpack.c.h.b16 %v530
        %v863 = vunpack.c.l.b16 %v531
        %v864 = vunpack.c.l.b16 %v532
        %v865 = vunpack.c.l.b16 %v533
        %v866 = vunpack.c.l.b16 %v534
        %v867 = vunpack.c.h.b16 %v531
        %v868 = vunpack.c.h.b16 %v532
        %v869 = vunpack.c.h.b16 %v533
        %v870 = vunpack.c.h.b16 %v534
        %v871 = vunpack.c.l.b16 %v535
        %v872 = vunpack.c.l.b16 %v536
        %v873 = vunpack.c.l.b16 %v537
        %v874 = vunpack.c.l.b16 %v538
        %v875 = vunpack.c.h.b16 %v535
        %v876 = vunpack.c.h.b16 %v536
        %v877 = vunpack.c.h.b16 %v537
        %v878 = vunpack.c.h.b16 %v538
        %v879 = vunpack.c.l.b16 %v539
        %v880 = vunpack.c.l.b16 %v540
        %v881 = vunpack.c.l.b16 %v541
        %v882 = vunpack.c.l.b16 %v542
        %v883 = vunpack.c.h.b16 %v539
        %v884 = vunpack.c.h.b16 %v540
        %v885 = vunpack.c.h.b16 %v541
        %v886 = vunpack.c.h.b16 %v542
        %v887 = vunpack.c.l.b16 %v543
        %v888 = vunpack.c.l.b16 %v544
        %v889 = vunpack.c.l.b16 %v545
        %v890 = vunpack.c.l.b16 %v546
        %v891 = vunpack.c.h.b16 %v543
        %v892 = vunpack.c.h.b16 %v544
        %v893 = vunpack.c.h.b16 %v545
        %v894 = vunpack.c.h.b16 %v546
        %v895 = vunpack.c.l.b16 %v547
        %v896 = vunpack.c.l.b16 %v548
        %v897 = vunpack.c.l.b16 %v549
        %v898 = vunpack.c.l.b16 %v550
        %v899 = vunpack.c.h.b16 %v547
        %v900 = vunpack.c.h.b16 %v548
        %v901 = vunpack.c.h.b16 %v549
        %v902 = vunpack.c.h.b16 %v550
        %v903 = vunpack.c.l.b16 %v551
        %v904 = vunpack.c.l.b16 %v552
        %v905 = vunpack.c.l.b16 %v553
        %v906 = vunpack.c.l.b16 %v554
        %v907 = vunpack.c.h.b16 %v551
        %v908 = vunpack.c.h.b16 %v552
        %v909 = vunpack.c.h.b16 %v553
        %v910 = vunpack.c.h.b16 %v554
        %v911 = vunpack.c.l.b16 %v555
        %v912 = vunpack.c.l.b16 %v556
        %v913 = vunpack.c.l.b16 %v557
        %v914 = vunpack.c.l.b16 %v558
        %v915 = vunpack.c.h.b16 %v555
        %v916 = vunpack.c.h.b16 %v556
        %v917 = vunpack.c.h.b16 %v557
        %v918 = vunpack.c.h.b16 %v558
        %v919 = vunpack.c.l.b16 %v559
        %v920 = vunpack.c.l.b16 %v560
        %v921 = vunpack.c.l.b16 %v561
        %v922 = vunpack.c.l.b16 %v562
        %v923 = vunpack.c.h.b16 %v559
        %v924 = vunpack.c.h.b16 %v560
        %v925 = vunpack.c.h.b16 %v561
        %v926 = vunpack.c.h.b16 %v562
        %v927 = vunpack.c.l.b16 %v563
        %v928 = vunpack.c.l.b16 %v564
        %v929 = vunpack.c.l.b16 %v565
        %v930 = vunpack.c.l.b16 %v566
        %v931 = vunpack.c.h.b16 %v563
        %v932 = vunpack.c.h.b16 %v564
        %v933 = vunpack.c.h.b16 %v565
        %v934 = vunpack.c.h.b16 %v566
        %v935 = vunpack.c.l.b16 %v567
        %v936 = vunpack.c.l.b16 %v568
        %v937 = vunpack.c.l.b16 %v569
        %v938 = vunpack.c.l.b16 %v570
        %v939 = vunpack.c.h.b16 %v567
        %v940 = vunpack.c.h.b16 %v568
        %v941 = vunpack.c.h.b16 %v569
        %v942 = vunpack.c.h.b16 %v570
        %v943 = vunpack.c.l.b16 %v571
        %v944 = vunpack.c.l.b16 %v572
        %v945 = vunpack.c.l.b16 %v573
        %v946 = vunpack.c.l.b16 %v574
        %v947 = vunpack.c.h.b16 %v571
        %v948 = vunpack.c.h.b16 %v572
        %v949 = vunpack.c.h.b16 %v573
        %v950 = vunpack.c.h.b16 %v574
        %v951 = vunpack.c.l.b16 %v575
        %v952 = vunpack.c.l.b16 %v576
        %v953 = vunpack.c.l.b16 %v577
        %v954 = vunpack.c.l.b16 %v578
        %v955 = vunpack.c.h.b16 %v575
        %v956 = vunpack.c.h.b16 %v576
        %v957 = vunpack.c.h.b16 %v577
        %v958 = vunpack.c.h.b16 %v578
        %v959 = vunpack.c.l.b16 %v579
        %v960 = vunpack.c.l.b16 %v580
        %v961 = vunpack.c.l.b16 %v581
        %v962 = vunpack.c.l.b16 %v582
        %v963 = vunpack.c.h.b16 %v579
        %v964 = vunpack.c.h.b16 %v580
        %v965 = vunpack.c.h.b16 %v581
        %v966 = vunpack.c.h.b16 %v582
        %v967 = vpack.c.b16 %v712, %v711
        %v968 = vpack.c.b16 %v714, %v713
        %v969 = vpack.c.b16 %v716, %v715
        %v970 = vpack.c.b16 %v718, %v717
        %v971 = vpack.c.b16 %v720, %v719
        %v972 = vpack.c.b16 %v722, %v721
        %v973 = vpack.c.b16 %v724, %v723
        %v974 = vpack.c.b16 %v726, %v725
        %v975 = vpack.c.b16 %v728, %v727
        %v976 = vpack.c.b16 %v730, %v729
        %v977 = vpack.c.b16 %v732, %v731
        %v978 = vpack.c.b16 %v734, %v733
        %v979 = vpack.c.b16 %v736, %v735
        %v980 = vpack.c.b16 %v738, %v737
        %v981 = vpack.c.b16 %v740, %v739
        %v982 = vpack.c.b16 %v742, %v741
        %v983 = vpack.c.b16 %v744, %v743
        %v984 = vpack.c.b16 %v746, %v745
        %v985 = vpack.c.b16 %v748, %v747
        %v986 = vpack.c.b16 %v750, %v749
        %v987 = vpack.c.b16 %v752, %v751
        %v988 = vpack.c.b16 %v754, %v753
        %v989 = vpack.c.b16 %v756, %v755
        %v990 = vpack.c.b16 %v758, %v757
        %v991 = vpack.c.b16 %v760, %v759
        %v992 = vpack.c.b16 %v762, %v761
        %v993 = vpack.c.b16 %v764, %v763
        %v994 = vpack.c.b16 %v766, %v765
        %v995 = vpack.c.b16 %v768, %v767
        %v996 = vpack.c.b16 %v770, %v769
        %v997 = vpack.c.b16 %v772, %v771
        %v998 = vpack.c.b16 %v774, %v773
        %v999 = vpack.c.b16 %v776, %v775
        %v1000 = vpack.c.b16 %v778, %v777
        %v1001 = vpack.c.b16 %v780, %v779
        %v1002 = vpack.c.b16 %v782, %v781
        %v1003 = vpack.c.b16 %v784, %v783
        %v1004 = vpack.c.b16 %v786, %v785
        %v1005 = vpack.c.b16 %v788, %v787
        %v1006 = vpack.c.b16 %v790, %v789
        %v1007 = vpack.c.b16 %v792, %v791
        %v1008 = vpack.c.b16 %v794, %v793
        %v1009 = vpack.c.b16 %v796, %v795
        %v1010 = vpack.c.b16 %v798, %v797
        %v1011 = vpack.c.b16 %v800, %v799
        %v1012 = vpack.c.b16 %v802, %v801
        %v1013 = vpack.c.b16 %v804, %v803
        %v1014 = vpack.c.b16 %v806, %v805
        %v1015 = vpack.c.b16 %v808, %v807
        %v1016 = vpack.c.b16 %v810, %v809
        %v1017 = vpack.c.b16 %v812, %v811
        %v1018 = vpack.c.b16 %v814, %v813
        %v1019 = vpack.c.b16 %v816, %v815
        %v1020 = vpack.c.b16 %v818, %v817
        %v1021 = vpack.c.b16 %v820, %v819
        %v1022 = vpack.c.b16 %v822, %v821
        %v1023 = vpack.c.b16 %v824, %v823
        %v1024 = vpack.c.b16 %v826, %v825
        %v1025 = vpack.c.b16 %v828, %v827
        %v1026 = vpack.c.b16 %v830, %v829
        %v1027 = vpack.c.b16 %v832, %v831
        %v1028 = vpack.c.b16 %v834, %v833
        %v1029 = vpack.c.b16 %v836, %v835
        %v1030 = vpack.c.b16 %v838, %v837
        %v1031 = vpack.c.b16 %v840, %v839
        %v1032 = vpack.c.b16 %v842, %v841
        %v1033 = vpack.c.b16 %v844, %v843
        %v1034 = vpack.c.b16 %v846, %v845
        %v1035 = vpack.c.b16 %v848, %v847
        %v1036 = vpack.c.b16 %v850, %v849
        %v1037 = vpack.c.b16 %v852, %v851
        %v1038 = vpack.c.b16 %v854, %v853
        %v1039 = vpack.c.b16 %v856, %v855
        %v1040 = vpack.c.b16 %v858, %v857
        %v1041 = vpack.c.b16 %v860, %v859
        %v1042 = vpack.c.b16 %v862, %v861
        %v1043 = vpack.c.b16 %v864, %v863
        %v1044 = vpack.c.b16 %v866, %v865
        %v1045 = vpack.c.b16 %v868, %v867
        %v1046 = vpack.c.b16 %v870, %v869
        %v1047 = vpack.c.b16 %v872, %v871
        %v1048 = vpack.c.b16 %v874, %v873
        %v1049 = vpack.c.b16 %v876, %v875
        %v1050 = vpack.c.b16 %v878, %v877
        %v1051 = vpack.c.b16 %v880, %v879
        %v1052 = vpack.c.b16 %v882, %v881
        %v1053 = vpack.c.b16 %v884, %v883
        %v1054 = vpack.c.b16 %v886, %v885
        %v1055 = vpack.c.b16 %v888, %v887
        %v1056 = vpack.c.b16 %v890, %v889
        %v1057 = vpack.c.b16 %v892, %v891
        %v1058 = vpack.c.b16 %v894, %v893
        %v1059 = vpack.c.b16 %v896, %v895
        %v1060 = vpack.c.b16 %v898, %v897
        %v1061 = vpack.c.b16 %v900, %v899
        %v1062 = vpack.c.b16 %v902, %v901
        %v1063 = vpack.c.b16 %v904, %v903
        %v1064 = vpack.c.b16 %v906, %v905
        %v1065 = vpack.c.b16 %v908, %v907
        %v1066 = vpack.c.b16 %v910, %v909
        %v1067 = vpack.c.b16 %v912, %v911
        %v1068 = vpack.c.b16 %v914, %v913
        %v1069 = vpack.c.b16 %v916, %v915
        %v1070 = vpack.c.b16 %v918, %v917
        %v1071 = vpack.c.b16 %v920, %v919
        %v1072 = vpack.c.b16 %v922, %v921
        %v1073 = vpack.c.b16 %v924, %v923
        %v1074 = vpack.c.b16 %v926, %v925
        %v1075 = vpack.c.b16 %v928, %v927
        %v1076 = vpack.c.b16 %v930, %v929
        %v1077 = vpack.c.b16 %v932, %v931
        %v1078 = vpack.c.b16 %v934, %v933
        %v1079 = vpack.c.b16 %v936, %v935
        %v1080 = vpack.c.b16 %v938, %v937
        %v1081 = vpack.c.b16 %v940, %v939
        %v1082 = vpack.c.b16 %v942, %v941
        %v1083 = vpack.c.b16 %v944, %v943
        %v1084 = vpack.c.b16 %v946, %v945
        %v1085 = vpack.c.b16 %v948, %v947
        %v1086 = vpack.c.b16 %v950, %v949
        %v1087 = vpack.c.b16 %v952, %v951
        %v1088 = vpack.c.b16 %v954, %v953
        %v1089 = vpack.c.b16 %v956, %v955
        %v1090 = vpack.c.b16 %v958, %v957
        %v1091 = vpack.c.b16 %v960, %v959
        %v1092 = vpack.c.b16 %v962, %v961
        %v1093 = vpack.c.b16 %v964, %v963
        %v1094 = vpack.c.b16 %v966, %v965
        %1223 = vst [vmem:[%s188] sm:$0xff] %v967
        %1224 = vst [vmem:[%s188 + $0x8] sm:$0xff] %v968
        %1225 = vst [vmem:[%s188 + $0x10] sm:$0xff] %v969
        %1226 = vst [vmem:[%s188 + $0x18] sm:$0xff] %v970
        %1227 = vst [vmem:[%s188 + $0x20] sm:$0xff] %v971
        %1228 = vst [vmem:[%s188 + $0x28] sm:$0xff] %v972
        %1229 = vst [vmem:[%s188 + $0x30] sm:$0xff] %v973
        %1230 = vst [vmem:[%s188 + $0x38] sm:$0xff] %v974
        %1231 = vst [vmem:[%s188 + $0x40] sm:$0xff] %v975
        %1232 = vst [vmem:[%s188 + $0x48] sm:$0xff] %v976
        %1233 = vst [vmem:[%s188 + $0x50] sm:$0xff] %v977
        %1234 = vst [vmem:[%s188 + $0x58] sm:$0xff] %v978
        %1235 = vst [vmem:[%s188 + $0x60] sm:$0xff] %v979
        %1236 = vst [vmem:[%s188 + $0x68] sm:$0xff] %v980
        %1237 = vst [vmem:[%s188 + $0x70] sm:$0xff] %v981
        %1238 = vst [vmem:[%s188 + $0x78] sm:$0xff] %v982
        %1239 = vst [vmem:[%s188 + $0x80] sm:$0xff] %v983
        %1240 = vst [vmem:[%s188 + $0x88] sm:$0xff] %v984
        %1241 = vst [vmem:[%s188 + $0x90] sm:$0xff] %v985
        %1242 = vst [vmem:[%s188 + $0x98] sm:$0xff] %v986
        %1243 = vst [vmem:[%s188 + $0xa0] sm:$0xff] %v987
        %1244 = vst [vmem:[%s188 + $0xa8] sm:$0xff] %v988
        %1245 = vst [vmem:[%s188 + $0xb0] sm:$0xff] %v989
        %1246 = vst [vmem:[%s188 + $0xb8] sm:$0xff] %v990
        %1247 = vst [vmem:[%s188 + $0xc0] sm:$0xff] %v991
        %1248 = vst [vmem:[%s188 + $0xc8] sm:$0xff] %v992
        %1249 = vst [vmem:[%s188 + $0xd0] sm:$0xff] %v993
        %1250 = vst [vmem:[%s188 + $0xd8] sm:$0xff] %v994
        %1251 = vst [vmem:[%s188 + $0xe0] sm:$0xff] %v995
        %1252 = vst [vmem:[%s188 + $0xe8] sm:$0xff] %v996
        %1253 = vst [vmem:[%s188 + $0xf0] sm:$0xff] %v997
        %1254 = vst [vmem:[%s188 + $0xf8] sm:$0xff] %v998
        %1255 = vst [vmem:[%s188 + $0x100] sm:$0xff] %v999
        %1256 = vst [vmem:[%s188 + $0x108] sm:$0xff] %v1000
        %1257 = vst [vmem:[%s188 + $0x110] sm:$0xff] %v1001
        %1258 = vst [vmem:[%s188 + $0x118] sm:$0xff] %v1002
        %1259 = vst [vmem:[%s188 + $0x120] sm:$0xff] %v1003
        %1260 = vst [vmem:[%s188 + $0x128] sm:$0xff] %v1004
        %1261 = vst [vmem:[%s188 + $0x130] sm:$0xff] %v1005
        %1262 = vst [vmem:[%s188 + $0x138] sm:$0xff] %v1006
        %1263 = vst [vmem:[%s188 + $0x140] sm:$0xff] %v1007
        %1264 = vst [vmem:[%s188 + $0x148] sm:$0xff] %v1008
        %1265 = vst [vmem:[%s188 + $0x150] sm:$0xff] %v1009
        %1266 = vst [vmem:[%s188 + $0x158] sm:$0xff] %v1010
        %1267 = vst [vmem:[%s188 + $0x160] sm:$0xff] %v1011
        %1268 = vst [vmem:[%s188 + $0x168] sm:$0xff] %v1012
        %1269 = vst [vmem:[%s188 + $0x170] sm:$0xff] %v1013
        %1270 = vst [vmem:[%s188 + $0x178] sm:$0xff] %v1014
        %1271 = vst [vmem:[%s188 + $0x180] sm:$0xff] %v1015
        %1272 = vst [vmem:[%s188 + $0x188] sm:$0xff] %v1016
        %1273 = vst [vmem:[%s188 + $0x190] sm:$0xff] %v1017
        %1274 = vst [vmem:[%s188 + $0x198] sm:$0xff] %v1018
        %1275 = vst [vmem:[%s188 + $0x1a0] sm:$0xff] %v1019
        %1276 = vst [vmem:[%s188 + $0x1a8] sm:$0xff] %v1020
        %1277 = vst [vmem:[%s188 + $0x1b0] sm:$0xff] %v1021
        %1278 = vst [vmem:[%s188 + $0x1b8] sm:$0xff] %v1022
        %1279 = vst [vmem:[%s188 + $0x1c0] sm:$0xff] %v1023
        %1280 = vst [vmem:[%s188 + $0x1c8] sm:$0xff] %v1024
        %1281 = vst [vmem:[%s188 + $0x1d0] sm:$0xff] %v1025
        %1282 = vst [vmem:[%s188 + $0x1d8] sm:$0xff] %v1026
        %1283 = vst [vmem:[%s188 + $0x1e0] sm:$0xff] %v1027
        %1284 = vst [vmem:[%s188 + $0x1e8] sm:$0xff] %v1028
        %1285 = vst [vmem:[%s188 + $0x1f0] sm:$0xff] %v1029
        %1286 = vst [vmem:[%s188 + $0x1f8] sm:$0xff] %v1030
        %1287 = vst [vmem:[%s188 + $0x200] sm:$0xff] %v1031
        %1288 = vst [vmem:[%s188 + $0x208] sm:$0xff] %v1032
        %1289 = vst [vmem:[%s188 + $0x210] sm:$0xff] %v1033
        %1290 = vst [vmem:[%s188 + $0x218] sm:$0xff] %v1034
        %1291 = vst [vmem:[%s188 + $0x220] sm:$0xff] %v1035
        %1292 = vst [vmem:[%s188 + $0x228] sm:$0xff] %v1036
        %1293 = vst [vmem:[%s188 + $0x230] sm:$0xff] %v1037
        %1294 = vst [vmem:[%s188 + $0x238] sm:$0xff] %v1038
        %1295 = vst [vmem:[%s188 + $0x240] sm:$0xff] %v1039
        %1296 = vst [vmem:[%s188 + $0x248] sm:$0xff] %v1040
        %1297 = vst [vmem:[%s188 + $0x250] sm:$0xff] %v1041
        %1298 = vst [vmem:[%s188 + $0x258] sm:$0xff] %v1042
        %1299 = vst [vmem:[%s188 + $0x260] sm:$0xff] %v1043
        %1300 = vst [vmem:[%s188 + $0x268] sm:$0xff] %v1044
        %1301 = vst [vmem:[%s188 + $0x270] sm:$0xff] %v1045
        %1302 = vst [vmem:[%s188 + $0x278] sm:$0xff] %v1046
        %1303 = vst [vmem:[%s188 + $0x280] sm:$0xff] %v1047
        %1304 = vst [vmem:[%s188 + $0x288] sm:$0xff] %v1048
        %1305 = vst [vmem:[%s188 + $0x290] sm:$0xff] %v1049
        %1306 = vst [vmem:[%s188 + $0x298] sm:$0xff] %v1050
        %1307 = vst [vmem:[%s188 + $0x2a0] sm:$0xff] %v1051
        %1308 = vst [vmem:[%s188 + $0x2a8] sm:$0xff] %v1052
        %1309 = vst [vmem:[%s188 + $0x2b0] sm:$0xff] %v1053
        %1310 = vst [vmem:[%s188 + $0x2b8] sm:$0xff] %v1054
        %1311 = vst [vmem:[%s188 + $0x2c0] sm:$0xff] %v1055
        %1312 = vst [vmem:[%s188 + $0x2c8] sm:$0xff] %v1056
        %1313 = vst [vmem:[%s188 + $0x2d0] sm:$0xff] %v1057
        %1314 = vst [vmem:[%s188 + $0x2d8] sm:$0xff] %v1058
        %1315 = vst [vmem:[%s188 + $0x2e0] sm:$0xff] %v1059
        %1316 = vst [vmem:[%s188 + $0x2e8] sm:$0xff] %v1060
        %1317 = vst [vmem:[%s188 + $0x2f0] sm:$0xff] %v1061
        %1318 = vst [vmem:[%s188 + $0x2f8] sm:$0xff] %v1062
        %1319 = vst [vmem:[%s188 + $0x300] sm:$0xff] %v1063
        %1320 = vst [vmem:[%s188 + $0x308] sm:$0xff] %v1064
        %1321 = vst [vmem:[%s188 + $0x310] sm:$0xff] %v1065
        %1322 = vst [vmem:[%s188 + $0x318] sm:$0xff] %v1066
        %1323 = vst [vmem:[%s188 + $0x320] sm:$0xff] %v1067
        %1324 = vst [vmem:[%s188 + $0x328] sm:$0xff] %v1068
        %1325 = vst [vmem:[%s188 + $0x330] sm:$0xff] %v1069
        %1326 = vst [vmem:[%s188 + $0x338] sm:$0xff] %v1070
        %1327 = vst [vmem:[%s188 + $0x340] sm:$0xff] %v1071
        %1328 = vst [vmem:[%s188 + $0x348] sm:$0xff] %v1072
        %1329 = vst [vmem:[%s188 + $0x350] sm:$0xff] %v1073
        %1330 = vst [vmem:[%s188 + $0x358] sm:$0xff] %v1074
        %1331 = vst [vmem:[%s188 + $0x360] sm:$0xff] %v1075
        %1332 = vst [vmem:[%s188 + $0x368] sm:$0xff] %v1076
        %1333 = vst [vmem:[%s188 + $0x370] sm:$0xff] %v1077
        %1334 = vst [vmem:[%s188 + $0x378] sm:$0xff] %v1078
        %1335 = vst [vmem:[%s188 + $0x380] sm:$0xff] %v1079
        %1336 = vst [vmem:[%s188 + $0x388] sm:$0xff] %v1080
        %1337 = vst [vmem:[%s188 + $0x390] sm:$0xff] %v1081
        %1338 = vst [vmem:[%s188 + $0x398] sm:$0xff] %v1082
        %1339 = vst [vmem:[%s188 + $0x3a0] sm:$0xff] %v1083
        %1340 = vst [vmem:[%s188 + $0x3a8] sm:$0xff] %v1084
        %1341 = vst [vmem:[%s188 + $0x3b0] sm:$0xff] %v1085
        %1342 = vst [vmem:[%s188 + $0x3b8] sm:$0xff] %v1086
        %1343 = vst [vmem:[%s188 + $0x3c0] sm:$0xff] %v1087
        %1344 = vst [vmem:[%s188 + $0x3c8] sm:$0xff] %v1088
        %1345 = vst [vmem:[%s188 + $0x3d0] sm:$0xff] %v1089
        %1346 = vst [vmem:[%s188 + $0x3d8] sm:$0xff] %v1090
        %1347 = vst [vmem:[%s188 + $0x3e0] sm:$0xff] %v1091
        %1348 = vst [vmem:[%s188 + $0x3e8] sm:$0xff] %v1092
        %1349 = vst [vmem:[%s188 + $0x3f0] sm:$0xff] %v1093
        %1350 = vst [vmem:[%s188 + $0x3f8] sm:$0xff] %v1094
        %p1351 = scmp.eq.s32.totalorder %s25, 0
        // Predicated region
        $region29: #{tpu_custom_call.1} parent=23 // pred_check
          %p1352 = pneg %p1351
        $region30: #{tpu_custom_call.1} parent=23 // pred_check_branch
          %1354 = sbr.rel (%p1352) target = $region32
        $region31: #{tpu_custom_call.1} parent=23 // pred_region
          %vm1355 = vcmask 7168
          %1356 = vst.msk [vmem:[%s195] sm:$0xff] %vm1355, 0.0
          %1357 = vst.msk [vmem:[%s195 + $0x8] sm:$0xff] %vm1355, 0.0
          %1358 = vst.msk [vmem:[%s195 + $0x10] sm:$0xff] %vm1355, 0.0
          %1359 = vst.msk [vmem:[%s195 + $0x18] sm:$0xff] %vm1355, 0.0
          %1360 = vst.msk [vmem:[%s195 + $0x20] sm:$0xff] %vm1355, 0.0
          %1361 = vst.msk [vmem:[%s195 + $0x28] sm:$0xff] %vm1355, 0.0
          %1362 = vst.msk [vmem:[%s195 + $0x30] sm:$0xff] %vm1355, 0.0
          %1363 = vst.msk [vmem:[%s195 + $0x38] sm:$0xff] %vm1355, 0.0
          %1364 = vst.msk [vmem:[%s195 + $0x40] sm:$0xff] %vm1355, 0.0
          %1365 = vst.msk [vmem:[%s195 + $0x48] sm:$0xff] %vm1355, 0.0
          %1366 = vst.msk [vmem:[%s195 + $0x50] sm:$0xff] %vm1355, 0.0
          %1367 = vst.msk [vmem:[%s195 + $0x58] sm:$0xff] %vm1355, 0.0
          %1368 = vst.msk [vmem:[%s195 + $0x60] sm:$0xff] %vm1355, 0.0
          %1369 = vst.msk [vmem:[%s195 + $0x68] sm:$0xff] %vm1355, 0.0
          %1370 = vst.msk [vmem:[%s195 + $0x70] sm:$0xff] %vm1355, 0.0
          %1371 = vst.msk [vmem:[%s195 + $0x78] sm:$0xff] %vm1355, 0.0
          %1372 = vst.msk [vmem:[%s195 + $0x80] sm:$0xff] %vm1355, 0.0
          %1373 = vst.msk [vmem:[%s195 + $0x88] sm:$0xff] %vm1355, 0.0
          %1374 = vst.msk [vmem:[%s195 + $0x90] sm:$0xff] %vm1355, 0.0
          %1375 = vst.msk [vmem:[%s195 + $0x98] sm:$0xff] %vm1355, 0.0
          %1376 = vst.msk [vmem:[%s195 + $0xa0] sm:$0xff] %vm1355, 0.0
          %1377 = vst.msk [vmem:[%s195 + $0xa8] sm:$0xff] %vm1355, 0.0
          %1378 = vst.msk [vmem:[%s195 + $0xb0] sm:$0xff] %vm1355, 0.0
          %1379 = vst.msk [vmem:[%s195 + $0xb8] sm:$0xff] %vm1355, 0.0
          %1380 = vst.msk [vmem:[%s195 + $0xc0] sm:$0xff] %vm1355, 0.0
          %1381 = vst.msk [vmem:[%s195 + $0xc8] sm:$0xff] %vm1355, 0.0
          %1382 = vst.msk [vmem:[%s195 + $0xd0] sm:$0xff] %vm1355, 0.0
          %1383 = vst.msk [vmem:[%s195 + $0xd8] sm:$0xff] %vm1355, 0.0
          %1384 = vst.msk [vmem:[%s195 + $0xe0] sm:$0xff] %vm1355, 0.0
          %1385 = vst.msk [vmem:[%s195 + $0xe8] sm:$0xff] %vm1355, 0.0
          %1386 = vst.msk [vmem:[%s195 + $0xf0] sm:$0xff] %vm1355, 0.0
          %1387 = vst.msk [vmem:[%s195 + $0xf8] sm:$0xff] %vm1355, 0.0
          %1388 = vst.msk [vmem:[%s195 + $0x100] sm:$0xff] %vm1355, 0.0
          %1389 = vst.msk [vmem:[%s195 + $0x108] sm:$0xff] %vm1355, 0.0
          %1390 = vst.msk [vmem:[%s195 + $0x110] sm:$0xff] %vm1355, 0.0
          %1391 = vst.msk [vmem:[%s195 + $0x118] sm:$0xff] %vm1355, 0.0
          %1392 = vst.msk [vmem:[%s195 + $0x120] sm:$0xff] %vm1355, 0.0
          %1393 = vst.msk [vmem:[%s195 + $0x128] sm:$0xff] %vm1355, 0.0
          %1394 = vst.msk [vmem:[%s195 + $0x130] sm:$0xff] %vm1355, 0.0
          %1395 = vst.msk [vmem:[%s195 + $0x138] sm:$0xff] %vm1355, 0.0
          %1396 = vst.msk [vmem:[%s195 + $0x140] sm:$0xff] %vm1355, 0.0
          %1397 = vst.msk [vmem:[%s195 + $0x148] sm:$0xff] %vm1355, 0.0
          %1398 = vst.msk [vmem:[%s195 + $0x150] sm:$0xff] %vm1355, 0.0
          %1399 = vst.msk [vmem:[%s195 + $0x158] sm:$0xff] %vm1355, 0.0
          %1400 = vst.msk [vmem:[%s195 + $0x160] sm:$0xff] %vm1355, 0.0
          %1401 = vst.msk [vmem:[%s195 + $0x168] sm:$0xff] %vm1355, 0.0
          %1402 = vst.msk [vmem:[%s195 + $0x170] sm:$0xff] %vm1355, 0.0
          %1403 = vst.msk [vmem:[%s195 + $0x178] sm:$0xff] %vm1355, 0.0
          %1404 = vst.msk [vmem:[%s195 + $0x180] sm:$0xff] %vm1355, 0.0
          %1405 = vst.msk [vmem:[%s195 + $0x188] sm:$0xff] %vm1355, 0.0
          %1406 = vst.msk [vmem:[%s195 + $0x190] sm:$0xff] %vm1355, 0.0
          %1407 = vst.msk [vmem:[%s195 + $0x198] sm:$0xff] %vm1355, 0.0
          %1408 = vst.msk [vmem:[%s195 + $0x1a0] sm:$0xff] %vm1355, 0.0
          %1409 = vst.msk [vmem:[%s195 + $0x1a8] sm:$0xff] %vm1355, 0.0
          %1410 = vst.msk [vmem:[%s195 + $0x1b0] sm:$0xff] %vm1355, 0.0
          %1411 = vst.msk [vmem:[%s195 + $0x1b8] sm:$0xff] %vm1355, 0.0
          %1412 = vst.msk [vmem:[%s195 + $0x1c0] sm:$0xff] %vm1355, 0.0
          %1413 = vst.msk [vmem:[%s195 + $0x1c8] sm:$0xff] %vm1355, 0.0
          %1414 = vst.msk [vmem:[%s195 + $0x1d0] sm:$0xff] %vm1355, 0.0
          %1415 = vst.msk [vmem:[%s195 + $0x1d8] sm:$0xff] %vm1355, 0.0
          %1416 = vst.msk [vmem:[%s195 + $0x1e0] sm:$0xff] %vm1355, 0.0
          %1417 = vst.msk [vmem:[%s195 + $0x1e8] sm:$0xff] %vm1355, 0.0
          %1418 = vst.msk [vmem:[%s195 + $0x1f0] sm:$0xff] %vm1355, 0.0
          %1419 = vst.msk [vmem:[%s195 + $0x1f8] sm:$0xff] %vm1355, 0.0
        $region32: #{tpu_custom_call.1} parent=23 // pred_fallthru
          _
        %v1420 = vld [vmem:[%s195] sm:$0xff]
        %v1421 = vld [vmem:[%s195 + $0x8] sm:$0xff]
        %v1422 = vld [vmem:[%s195 + $0x10] sm:$0xff]
        %v1423 = vld [vmem:[%s195 + $0x18] sm:$0xff]
        %v1424 = vld [vmem:[%s195 + $0x20] sm:$0xff]
        %v1425 = vld [vmem:[%s195 + $0x28] sm:$0xff]
        %v1426 = vld [vmem:[%s195 + $0x30] sm:$0xff]
        %v1427 = vld [vmem:[%s195 + $0x38] sm:$0xff]
        %v1428 = vld [vmem:[%s195 + $0x40] sm:$0xff]
        %v1429 = vld [vmem:[%s195 + $0x48] sm:$0xff]
        %v1430 = vld [vmem:[%s195 + $0x50] sm:$0xff]
        %v1431 = vld [vmem:[%s195 + $0x58] sm:$0xff]
        %v1432 = vld [vmem:[%s195 + $0x60] sm:$0xff]
        %v1433 = vld [vmem:[%s195 + $0x68] sm:$0xff]
        %v1434 = vld [vmem:[%s195 + $0x70] sm:$0xff]
        %v1435 = vld [vmem:[%s195 + $0x78] sm:$0xff]
        %v1436 = vld [vmem:[%s195 + $0x80] sm:$0xff]
        %v1437 = vld [vmem:[%s195 + $0x88] sm:$0xff]
        %v1438 = vld [vmem:[%s195 + $0x90] sm:$0xff]
        %v1439 = vld [vmem:[%s195 + $0x98] sm:$0xff]
        %v1440 = vld [vmem:[%s195 + $0xa0] sm:$0xff]
        %v1441 = vld [vmem:[%s195 + $0xa8] sm:$0xff]
        %v1442 = vld [vmem:[%s195 + $0xb0] sm:$0xff]
        %v1443 = vld [vmem:[%s195 + $0xb8] sm:$0xff]
        %v1444 = vld [vmem:[%s195 + $0xc0] sm:$0xff]
        %v1445 = vld [vmem:[%s195 + $0xc8] sm:$0xff]
        %v1446 = vld [vmem:[%s195 + $0xd0] sm:$0xff]
        %v1447 = vld [vmem:[%s195 + $0xd8] sm:$0xff]
        %v1448 = vld [vmem:[%s195 + $0xe0] sm:$0xff]
        %v1449 = vld [vmem:[%s195 + $0xe8] sm:$0xff]
        %v1450 = vld [vmem:[%s195 + $0xf0] sm:$0xff]
        %v1451 = vld [vmem:[%s195 + $0xf8] sm:$0xff]
        %v1452 = vld [vmem:[%s195 + $0x100] sm:$0xff]
        %v1453 = vld [vmem:[%s195 + $0x108] sm:$0xff]
        %v1454 = vld [vmem:[%s195 + $0x110] sm:$0xff]
        %v1455 = vld [vmem:[%s195 + $0x118] sm:$0xff]
        %v1456 = vld [vmem:[%s195 + $0x120] sm:$0xff]
        %v1457 = vld [vmem:[%s195 + $0x128] sm:$0xff]
        %v1458 = vld [vmem:[%s195 + $0x130] sm:$0xff]
        %v1459 = vld [vmem:[%s195 + $0x138] sm:$0xff]
        %v1460 = vld [vmem:[%s195 + $0x140] sm:$0xff]
        %v1461 = vld [vmem:[%s195 + $0x148] sm:$0xff]
        %v1462 = vld [vmem:[%s195 + $0x150] sm:$0xff]
        %v1463 = vld [vmem:[%s195 + $0x158] sm:$0xff]
        %v1464 = vld [vmem:[%s195 + $0x160] sm:$0xff]
        %v1465 = vld [vmem:[%s195 + $0x168] sm:$0xff]
        %v1466 = vld [vmem:[%s195 + $0x170] sm:$0xff]
        %v1467 = vld [vmem:[%s195 + $0x178] sm:$0xff]
        %v1468 = vld [vmem:[%s195 + $0x180] sm:$0xff]
        %v1469 = vld [vmem:[%s195 + $0x188] sm:$0xff]
        %v1470 = vld [vmem:[%s195 + $0x190] sm:$0xff]
        %v1471 = vld [vmem:[%s195 + $0x198] sm:$0xff]
        %v1472 = vld [vmem:[%s195 + $0x1a0] sm:$0xff]
        %v1473 = vld [vmem:[%s195 + $0x1a8] sm:$0xff]
        %v1474 = vld [vmem:[%s195 + $0x1b0] sm:$0xff]
        %v1475 = vld [vmem:[%s195 + $0x1b8] sm:$0xff]
        %v1476 = vld [vmem:[%s195 + $0x1c0] sm:$0xff]
        %v1477 = vld [vmem:[%s195 + $0x1c8] sm:$0xff]
        %v1478 = vld [vmem:[%s195 + $0x1d0] sm:$0xff]
        %v1479 = vld [vmem:[%s195 + $0x1d8] sm:$0xff]
        %v1480 = vld [vmem:[%s195 + $0x1e0] sm:$0xff]
        %v1481 = vld [vmem:[%s195 + $0x1e8] sm:$0xff]
        %v1482 = vld [vmem:[%s195 + $0x1f0] sm:$0xff]
        %v1483 = vld [vmem:[%s195 + $0x1f8] sm:$0xff]
        %v1484 = vadd.f32 %v199, %v200
        %v1485 = vadd.f32 %v1484, %v201
        %v1486 = vadd.f32 %v1485, %v202
        %1487 = vadd.xlane.f32.xlu0 %v1486
        %v1488 = vpop.xlane.xlu0 %1487
        %v1489 = vadd.f32 %v203, %v204
        %v1490 = vadd.f32 %v1489, %v205
        %v1491 = vadd.f32 %v1490, %v206
        %1492 = vadd.xlane.f32.xlu0 %v1491
        %v1493 = vpop.xlane.xlu0 %1492
        %v1494 = vadd.f32 %v207, %v208
        %v1495 = vadd.f32 %v1494, %v209
        %v1496 = vadd.f32 %v1495, %v210
        %1497 = vadd.xlane.f32.xlu0 %v1496
        %v1498 = vpop.xlane.xlu0 %1497
        %v1499 = vadd.f32 %v211, %v212
        %v1500 = vadd.f32 %v1499, %v213
        %v1501 = vadd.f32 %v1500, %v214
        %1502 = vadd.xlane.f32.xlu0 %v1501
        %v1503 = vpop.xlane.xlu0 %1502
        %v1504 = vadd.f32 %v215, %v216
        %v1505 = vadd.f32 %v1504, %v217
        %v1506 = vadd.f32 %v1505, %v218
        %1507 = vadd.xlane.f32.xlu0 %v1506
        %v1508 = vpop.xlane.xlu0 %1507
        %v1509 = vadd.f32 %v219, %v220
        %v1510 = vadd.f32 %v1509, %v221
        %v1511 = vadd.f32 %v1510, %v222
        %1512 = vadd.xlane.f32.xlu0 %v1511
        %v1513 = vpop.xlane.xlu0 %1512
        %v1514 = vadd.f32 %v223, %v224
        %v1515 = vadd.f32 %v1514, %v225
        %v1516 = vadd.f32 %v1515, %v226
        %1517 = vadd.xlane.f32.xlu0 %v1516
        %v1518 = vpop.xlane.xlu0 %1517
        %v1519 = vadd.f32 %v227, %v228
        %v1520 = vadd.f32 %v1519, %v229
        %v1521 = vadd.f32 %v1520, %v230
        %1522 = vadd.xlane.f32.xlu0 %v1521
        %v1523 = vpop.xlane.xlu0 %1522
        %v1524 = vadd.f32 %v231, %v232
        %v1525 = vadd.f32 %v1524, %v233
        %v1526 = vadd.f32 %v1525, %v234
        %1527 = vadd.xlane.f32.xlu0 %v1526
        %v1528 = vpop.xlane.xlu0 %1527
        %v1529 = vadd.f32 %v235, %v236
        %v1530 = vadd.f32 %v1529, %v237
        %v1531 = vadd.f32 %v1530, %v238
        %1532 = vadd.xlane.f32.xlu0 %v1531
        %v1533 = vpop.xlane.xlu0 %1532
        %v1534 = vadd.f32 %v239, %v240
        %v1535 = vadd.f32 %v1534, %v241
        %v1536 = vadd.f32 %v1535, %v242
        %1537 = vadd.xlane.f32.xlu0 %v1536
        %v1538 = vpop.xlane.xlu0 %1537
        %v1539 = vadd.f32 %v243, %v244
        %v1540 = vadd.f32 %v1539, %v245
        %v1541 = vadd.f32 %v1540, %v246
        %1542 = vadd.xlane.f32.xlu0 %v1541
        %v1543 = vpop.xlane.xlu0 %1542
        %v1544 = vadd.f32 %v247, %v248
        %v1545 = vadd.f32 %v1544, %v249
        %v1546 = vadd.f32 %v1545, %v250
        %1547 = vadd.xlane.f32.xlu0 %v1546
        %v1548 = vpop.xlane.xlu0 %1547
        %v1549 = vadd.f32 %v251, %v252
        %v1550 = vadd.f32 %v1549, %v253
        %v1551 = vadd.f32 %v1550, %v254
        %1552 = vadd.xlane.f32.xlu0 %v1551
        %v1553 = vpop.xlane.xlu0 %1552
        %v1554 = vadd.f32 %v255, %v256
        %v1555 = vadd.f32 %v1554, %v257
        %v1556 = vadd.f32 %v1555, %v258
        %1557 = vadd.xlane.f32.xlu0 %v1556
        %v1558 = vpop.xlane.xlu0 %1557
        %v1559 = vadd.f32 %v259, %v260
        %v1560 = vadd.f32 %v1559, %v261
        %v1561 = vadd.f32 %v1560, %v262
        %1562 = vadd.xlane.f32.xlu0 %v1561
        %v1563 = vpop.xlane.xlu0 %1562
        %v1564 = vadd.f32 %v263, %v264
        %v1565 = vadd.f32 %v1564, %v265
        %v1566 = vadd.f32 %v1565, %v266
        %1567 = vadd.xlane.f32.xlu0 %v1566
        %v1568 = vpop.xlane.xlu0 %1567
        %v1569 = vadd.f32 %v267, %v268
        %v1570 = vadd.f32 %v1569, %v269
        %v1571 = vadd.f32 %v1570, %v270
        %1572 = vadd.xlane.f32.xlu0 %v1571
        %v1573 = vpop.xlane.xlu0 %1572
        %v1574 = vadd.f32 %v271, %v272
        %v1575 = vadd.f32 %v1574, %v273
        %v1576 = vadd.f32 %v1575, %v274
        %1577 = vadd.xlane.f32.xlu0 %v1576
        %v1578 = vpop.xlane.xlu0 %1577
        %v1579 = vadd.f32 %v275, %v276
        %v1580 = vadd.f32 %v1579, %v277
        %v1581 = vadd.f32 %v1580, %v278
        %1582 = vadd.xlane.f32.xlu0 %v1581
        %v1583 = vpop.xlane.xlu0 %1582
        %v1584 = vadd.f32 %v279, %v280
        %v1585 = vadd.f32 %v1584, %v281
        %v1586 = vadd.f32 %v1585, %v282
        %1587 = vadd.xlane.f32.xlu0 %v1586
        %v1588 = vpop.xlane.xlu0 %1587
        %v1589 = vadd.f32 %v283, %v284
        %v1590 = vadd.f32 %v1589, %v285
        %v1591 = vadd.f32 %v1590, %v286
        %1592 = vadd.xlane.f32.xlu0 %v1591
        %v1593 = vpop.xlane.xlu0 %1592
        %v1594 = vadd.f32 %v287, %v288
        %v1595 = vadd.f32 %v1594, %v289
        %v1596 = vadd.f32 %v1595, %v290
        %1597 = vadd.xlane.f32.xlu0 %v1596
        %v1598 = vpop.xlane.xlu0 %1597
        %v1599 = vadd.f32 %v291, %v292
        %v1600 = vadd.f32 %v1599, %v293
        %v1601 = vadd.f32 %v1600, %v294
        %1602 = vadd.xlane.f32.xlu0 %v1601
        %v1603 = vpop.xlane.xlu0 %1602
        %v1604 = vadd.f32 %v295, %v296
        %v1605 = vadd.f32 %v1604, %v297
        %v1606 = vadd.f32 %v1605, %v298
        %1607 = vadd.xlane.f32.xlu0 %v1606
        %v1608 = vpop.xlane.xlu0 %1607
        %v1609 = vadd.f32 %v299, %v300
        %v1610 = vadd.f32 %v1609, %v301
        %v1611 = vadd.f32 %v1610, %v302
        %1612 = vadd.xlane.f32.xlu0 %v1611
        %v1613 = vpop.xlane.xlu0 %1612
        %v1614 = vadd.f32 %v303, %v304
        %v1615 = vadd.f32 %v1614, %v305
        %v1616 = vadd.f32 %v1615, %v306
        %1617 = vadd.xlane.f32.xlu0 %v1616
        %v1618 = vpop.xlane.xlu0 %1617
        %v1619 = vadd.f32 %v307, %v308
        %v1620 = vadd.f32 %v1619, %v309
        %v1621 = vadd.f32 %v1620, %v310
        %1622 = vadd.xlane.f32.xlu0 %v1621
        %v1623 = vpop.xlane.xlu0 %1622
        %v1624 = vadd.f32 %v311, %v312
        %v1625 = vadd.f32 %v1624, %v313
        %v1626 = vadd.f32 %v1625, %v314
        %1627 = vadd.xlane.f32.xlu0 %v1626
        %v1628 = vpop.xlane.xlu0 %1627
        %v1629 = vadd.f32 %v315, %v316
        %v1630 = vadd.f32 %v1629, %v317
        %v1631 = vadd.f32 %v1630, %v318
        %1632 = vadd.xlane.f32.xlu0 %v1631
        %v1633 = vpop.xlane.xlu0 %1632
        %v1634 = vadd.f32 %v319, %v320
        %v1635 = vadd.f32 %v1634, %v321
        %v1636 = vadd.f32 %v1635, %v322
        %1637 = vadd.xlane.f32.xlu0 %v1636
        %v1638 = vpop.xlane.xlu0 %1637
        %v1639 = vadd.f32 %v323, %v324
        %v1640 = vadd.f32 %v1639, %v325
        %v1641 = vadd.f32 %v1640, %v326
        %1642 = vadd.xlane.f32.xlu0 %v1641
        %v1643 = vpop.xlane.xlu0 %1642
        %v1644 = vadd.f32 %v327, %v328
        %v1645 = vadd.f32 %v1644, %v329
        %v1646 = vadd.f32 %v1645, %v330
        %1647 = vadd.xlane.f32.xlu0 %v1646
        %v1648 = vpop.xlane.xlu0 %1647
        %v1649 = vadd.f32 %v331, %v332
        %v1650 = vadd.f32 %v1649, %v333
        %v1651 = vadd.f32 %v1650, %v334
        %1652 = vadd.xlane.f32.xlu0 %v1651
        %v1653 = vpop.xlane.xlu0 %1652
        %v1654 = vadd.f32 %v335, %v336
        %v1655 = vadd.f32 %v1654, %v337
        %v1656 = vadd.f32 %v1655, %v338
        %1657 = vadd.xlane.f32.xlu0 %v1656
        %v1658 = vpop.xlane.xlu0 %1657
        %v1659 = vadd.f32 %v339, %v340
        %v1660 = vadd.f32 %v1659, %v341
        %v1661 = vadd.f32 %v1660, %v342
        %1662 = vadd.xlane.f32.xlu0 %v1661
        %v1663 = vpop.xlane.xlu0 %1662
        %v1664 = vadd.f32 %v343, %v344
        %v1665 = vadd.f32 %v1664, %v345
        %v1666 = vadd.f32 %v1665, %v346
        %1667 = vadd.xlane.f32.xlu0 %v1666
        %v1668 = vpop.xlane.xlu0 %1667
        %v1669 = vadd.f32 %v347, %v348
        %v1670 = vadd.f32 %v1669, %v349
        %v1671 = vadd.f32 %v1670, %v350
        %1672 = vadd.xlane.f32.xlu0 %v1671
        %v1673 = vpop.xlane.xlu0 %1672
        %v1674 = vadd.f32 %v351, %v352
        %v1675 = vadd.f32 %v1674, %v353
        %v1676 = vadd.f32 %v1675, %v354
        %1677 = vadd.xlane.f32.xlu0 %v1676
        %v1678 = vpop.xlane.xlu0 %1677
        %v1679 = vadd.f32 %v355, %v356
        %v1680 = vadd.f32 %v1679, %v357
        %v1681 = vadd.f32 %v1680, %v358
        %1682 = vadd.xlane.f32.xlu0 %v1681
        %v1683 = vpop.xlane.xlu0 %1682
        %v1684 = vadd.f32 %v359, %v360
        %v1685 = vadd.f32 %v1684, %v361
        %v1686 = vadd.f32 %v1685, %v362
        %1687 = vadd.xlane.f32.xlu0 %v1686
        %v1688 = vpop.xlane.xlu0 %1687
        %v1689 = vadd.f32 %v363, %v364
        %v1690 = vadd.f32 %v1689, %v365
        %v1691 = vadd.f32 %v1690, %v366
        %1692 = vadd.xlane.f32.xlu0 %v1691
        %v1693 = vpop.xlane.xlu0 %1692
        %v1694 = vadd.f32 %v367, %v368
        %v1695 = vadd.f32 %v1694, %v369
        %v1696 = vadd.f32 %v1695, %v370
        %1697 = vadd.xlane.f32.xlu0 %v1696
        %v1698 = vpop.xlane.xlu0 %1697
        %v1699 = vadd.f32 %v371, %v372
        %v1700 = vadd.f32 %v1699, %v373
        %v1701 = vadd.f32 %v1700, %v374
        %1702 = vadd.xlane.f32.xlu0 %v1701
        %v1703 = vpop.xlane.xlu0 %1702
        %v1704 = vadd.f32 %v375, %v376
        %v1705 = vadd.f32 %v1704, %v377
        %v1706 = vadd.f32 %v1705, %v378
        %1707 = vadd.xlane.f32.xlu0 %v1706
        %v1708 = vpop.xlane.xlu0 %1707
        %v1709 = vadd.f32 %v379, %v380
        %v1710 = vadd.f32 %v1709, %v381
        %v1711 = vadd.f32 %v1710, %v382
        %1712 = vadd.xlane.f32.xlu0 %v1711
        %v1713 = vpop.xlane.xlu0 %1712
        %v1714 = vadd.f32 %v383, %v384
        %v1715 = vadd.f32 %v1714, %v385
        %v1716 = vadd.f32 %v1715, %v386
        %1717 = vadd.xlane.f32.xlu0 %v1716
        %v1718 = vpop.xlane.xlu0 %1717
        %v1719 = vadd.f32 %v387, %v388
        %v1720 = vadd.f32 %v1719, %v389
        %v1721 = vadd.f32 %v1720, %v390
        %1722 = vadd.xlane.f32.xlu0 %v1721
        %v1723 = vpop.xlane.xlu0 %1722
        %v1724 = vadd.f32 %v391, %v392
        %v1725 = vadd.f32 %v1724, %v393
        %v1726 = vadd.f32 %v1725, %v394
        %1727 = vadd.xlane.f32.xlu0 %v1726
        %v1728 = vpop.xlane.xlu0 %1727
        %v1729 = vadd.f32 %v395, %v396
        %v1730 = vadd.f32 %v1729, %v397
        %v1731 = vadd.f32 %v1730, %v398
        %1732 = vadd.xlane.f32.xlu0 %v1731
        %v1733 = vpop.xlane.xlu0 %1732
        %v1734 = vadd.f32 %v399, %v400
        %v1735 = vadd.f32 %v1734, %v401
        %v1736 = vadd.f32 %v1735, %v402
        %1737 = vadd.xlane.f32.xlu0 %v1736
        %v1738 = vpop.xlane.xlu0 %1737
        %v1739 = vadd.f32 %v403, %v404
        %v1740 = vadd.f32 %v1739, %v405
        %v1741 = vadd.f32 %v1740, %v406
        %1742 = vadd.xlane.f32.xlu0 %v1741
        %v1743 = vpop.xlane.xlu0 %1742
        %v1744 = vadd.f32 %v407, %v408
        %v1745 = vadd.f32 %v1744, %v409
        %v1746 = vadd.f32 %v1745, %v410
        %1747 = vadd.xlane.f32.xlu0 %v1746
        %v1748 = vpop.xlane.xlu0 %1747
        %v1749 = vadd.f32 %v411, %v412
        %v1750 = vadd.f32 %v1749, %v413
        %v1751 = vadd.f32 %v1750, %v414
        %1752 = vadd.xlane.f32.xlu0 %v1751
        %v1753 = vpop.xlane.xlu0 %1752
        %v1754 = vadd.f32 %v415, %v416
        %v1755 = vadd.f32 %v1754, %v417
        %v1756 = vadd.f32 %v1755, %v418
        %1757 = vadd.xlane.f32.xlu0 %v1756
        %v1758 = vpop.xlane.xlu0 %1757
        %v1759 = vadd.f32 %v419, %v420
        %v1760 = vadd.f32 %v1759, %v421
        %v1761 = vadd.f32 %v1760, %v422
        %1762 = vadd.xlane.f32.xlu0 %v1761
        %v1763 = vpop.xlane.xlu0 %1762
        %v1764 = vadd.f32 %v423, %v424
        %v1765 = vadd.f32 %v1764, %v425
        %v1766 = vadd.f32 %v1765, %v426
        %1767 = vadd.xlane.f32.xlu0 %v1766
        %v1768 = vpop.xlane.xlu0 %1767
        %v1769 = vadd.f32 %v427, %v428
        %v1770 = vadd.f32 %v1769, %v429
        %v1771 = vadd.f32 %v1770, %v430
        %1772 = vadd.xlane.f32.xlu0 %v1771
        %v1773 = vpop.xlane.xlu0 %1772
        %v1774 = vadd.f32 %v431, %v432
        %v1775 = vadd.f32 %v1774, %v433
        %v1776 = vadd.f32 %v1775, %v434
        %1777 = vadd.xlane.f32.xlu0 %v1776
        %v1778 = vpop.xlane.xlu0 %1777
        %v1779 = vadd.f32 %v435, %v436
        %v1780 = vadd.f32 %v1779, %v437
        %v1781 = vadd.f32 %v1780, %v438
        %1782 = vadd.xlane.f32.xlu0 %v1781
        %v1783 = vpop.xlane.xlu0 %1782
        %v1784 = vadd.f32 %v439, %v440
        %v1785 = vadd.f32 %v1784, %v441
        %v1786 = vadd.f32 %v1785, %v442
        %1787 = vadd.xlane.f32.xlu0 %v1786
        %v1788 = vpop.xlane.xlu0 %1787
        %v1789 = vadd.f32 %v443, %v444
        %v1790 = vadd.f32 %v1789, %v445
        %v1791 = vadd.f32 %v1790, %v446
        %1792 = vadd.xlane.f32.xlu0 %v1791
        %v1793 = vpop.xlane.xlu0 %1792
        %v1794 = vadd.f32 %v447, %v448
        %v1795 = vadd.f32 %v1794, %v449
        %v1796 = vadd.f32 %v1795, %v450
        %1797 = vadd.xlane.f32.xlu0 %v1796
        %v1798 = vpop.xlane.xlu0 %1797
        %v1799 = vadd.f32 %v451, %v452
        %v1800 = vadd.f32 %v1799, %v453
        %v1801 = vadd.f32 %v1800, %v454
        %1802 = vadd.xlane.f32.xlu0 %v1801
        %v1803 = vpop.xlane.xlu0 %1802
        %v1804 = vadd.f32 %v1420, %v1488
        %v1805 = vadd.f32 %v1421, %v1493
        %v1806 = vadd.f32 %v1422, %v1498
        %v1807 = vadd.f32 %v1423, %v1503
        %v1808 = vadd.f32 %v1424, %v1508
        %v1809 = vadd.f32 %v1425, %v1513
        %v1810 = vadd.f32 %v1426, %v1518
        %v1811 = vadd.f32 %v1427, %v1523
        %v1812 = vadd.f32 %v1428, %v1528
        %v1813 = vadd.f32 %v1429, %v1533
        %v1814 = vadd.f32 %v1430, %v1538
        %v1815 = vadd.f32 %v1431, %v1543
        %v1816 = vadd.f32 %v1432, %v1548
        %v1817 = vadd.f32 %v1433, %v1553
        %v1818 = vadd.f32 %v1434, %v1558
        %v1819 = vadd.f32 %v1435, %v1563
        %v1820 = vadd.f32 %v1436, %v1568
        %v1821 = vadd.f32 %v1437, %v1573
        %v1822 = vadd.f32 %v1438, %v1578
        %v1823 = vadd.f32 %v1439, %v1583
        %v1824 = vadd.f32 %v1440, %v1588
        %v1825 = vadd.f32 %v1441, %v1593
        %v1826 = vadd.f32 %v1442, %v1598
        %v1827 = vadd.f32 %v1443, %v1603
        %v1828 = vadd.f32 %v1444, %v1608
        %v1829 = vadd.f32 %v1445, %v1613
        %v1830 = vadd.f32 %v1446, %v1618
        %v1831 = vadd.f32 %v1447, %v1623
        %v1832 = vadd.f32 %v1448, %v1628
        %v1833 = vadd.f32 %v1449, %v1633
        %v1834 = vadd.f32 %v1450, %v1638
        %v1835 = vadd.f32 %v1451, %v1643
        %v1836 = vadd.f32 %v1452, %v1648
        %v1837 = vadd.f32 %v1453, %v1653
        %v1838 = vadd.f32 %v1454, %v1658
        %v1839 = vadd.f32 %v1455, %v1663
        %v1840 = vadd.f32 %v1456, %v1668
        %v1841 = vadd.f32 %v1457, %v1673
        %v1842 = vadd.f32 %v1458, %v1678
        %v1843 = vadd.f32 %v1459, %v1683
        %v1844 = vadd.f32 %v1460, %v1688
        %v1845 = vadd.f32 %v1461, %v1693
        %v1846 = vadd.f32 %v1462, %v1698
        %v1847 = vadd.f32 %v1463, %v1703
        %v1848 = vadd.f32 %v1464, %v1708
        %v1849 = vadd.f32 %v1465, %v1713
        %v1850 = vadd.f32 %v1466, %v1718
        %v1851 = vadd.f32 %v1467, %v1723
        %v1852 = vadd.f32 %v1468, %v1728
        %v1853 = vadd.f32 %v1469, %v1733
        %v1854 = vadd.f32 %v1470, %v1738
        %v1855 = vadd.f32 %v1471, %v1743
        %v1856 = vadd.f32 %v1472, %v1748
        %v1857 = vadd.f32 %v1473, %v1753
        %v1858 = vadd.f32 %v1474, %v1758
        %v1859 = vadd.f32 %v1475, %v1763
        %v1860 = vadd.f32 %v1476, %v1768
        %v1861 = vadd.f32 %v1477, %v1773
        %v1862 = vadd.f32 %v1478, %v1778
        %v1863 = vadd.f32 %v1479, %v1783
        %v1864 = vadd.f32 %v1480, %v1788
        %v1865 = vadd.f32 %v1481, %v1793
        %v1866 = vadd.f32 %v1482, %v1798
        %v1867 = vadd.f32 %v1483, %v1803
        %vm1868 = vcmask 7168
        %1869 = vst.msk [vmem:[%s195] sm:$0xff] %vm1868, %v1804
        %1870 = vst.msk [vmem:[%s195 + $0x8] sm:$0xff] %vm1868, %v1805
        %1871 = vst.msk [vmem:[%s195 + $0x10] sm:$0xff] %vm1868, %v1806
        %1872 = vst.msk [vmem:[%s195 + $0x18] sm:$0xff] %vm1868, %v1807
        %1873 = vst.msk [vmem:[%s195 + $0x20] sm:$0xff] %vm1868, %v1808
        %1874 = vst.msk [vmem:[%s195 + $0x28] sm:$0xff] %vm1868, %v1809
        %1875 = vst.msk [vmem:[%s195 + $0x30] sm:$0xff] %vm1868, %v1810
        %1876 = vst.msk [vmem:[%s195 + $0x38] sm:$0xff] %vm1868, %v1811
        %1877 = vst.msk [vmem:[%s195 + $0x40] sm:$0xff] %vm1868, %v1812
        %1878 = vst.msk [vmem:[%s195 + $0x48] sm:$0xff] %vm1868, %v1813
        %1879 = vst.msk [vmem:[%s195 + $0x50] sm:$0xff] %vm1868, %v1814
        %1880 = vst.msk [vmem:[%s195 + $0x58] sm:$0xff] %vm1868, %v1815
        %1881 = vst.msk [vmem:[%s195 + $0x60] sm:$0xff] %vm1868, %v1816
        %1882 = vst.msk [vmem:[%s195 + $0x68] sm:$0xff] %vm1868, %v1817
        %1883 = vst.msk [vmem:[%s195 + $0x70] sm:$0xff] %vm1868, %v1818
        %1884 = vst.msk [vmem:[%s195 + $0x78] sm:$0xff] %vm1868, %v1819
        %1885 = vst.msk [vmem:[%s195 + $0x80] sm:$0xff] %vm1868, %v1820
        %1886 = vst.msk [vmem:[%s195 + $0x88] sm:$0xff] %vm1868, %v1821
        %1887 = vst.msk [vmem:[%s195 + $0x90] sm:$0xff] %vm1868, %v1822
        %1888 = vst.msk [vmem:[%s195 + $0x98] sm:$0xff] %vm1868, %v1823
        %1889 = vst.msk [vmem:[%s195 + $0xa0] sm:$0xff] %vm1868, %v1824
        %1890 = vst.msk [vmem:[%s195 + $0xa8] sm:$0xff] %vm1868, %v1825
        %1891 = vst.msk [vmem:[%s195 + $0xb0] sm:$0xff] %vm1868, %v1826
        %1892 = vst.msk [vmem:[%s195 + $0xb8] sm:$0xff] %vm1868, %v1827
        %1893 = vst.msk [vmem:[%s195 + $0xc0] sm:$0xff] %vm1868, %v1828
        %1894 = vst.msk [vmem:[%s195 + $0xc8] sm:$0xff] %vm1868, %v1829
        %1895 = vst.msk [vmem:[%s195 + $0xd0] sm:$0xff] %vm1868, %v1830
        %1896 = vst.msk [vmem:[%s195 + $0xd8] sm:$0xff] %vm1868, %v1831
        %1897 = vst.msk [vmem:[%s195 + $0xe0] sm:$0xff] %vm1868, %v1832
        %1898 = vst.msk [vmem:[%s195 + $0xe8] sm:$0xff] %vm1868, %v1833
        %1899 = vst.msk [vmem:[%s195 + $0xf0] sm:$0xff] %vm1868, %v1834
        %1900 = vst.msk [vmem:[%s195 + $0xf8] sm:$0xff] %vm1868, %v1835
        %1901 = vst.msk [vmem:[%s195 + $0x100] sm:$0xff] %vm1868, %v1836
        %1902 = vst.msk [vmem:[%s195 + $0x108] sm:$0xff] %vm1868, %v1837
        %1903 = vst.msk [vmem:[%s195 + $0x110] sm:$0xff] %vm1868, %v1838
        %1904 = vst.msk [vmem:[%s195 + $0x118] sm:$0xff] %vm1868, %v1839
        %1905 = vst.msk [vmem:[%s195 + $0x120] sm:$0xff] %vm1868, %v1840
        %1906 = vst.msk [vmem:[%s195 + $0x128] sm:$0xff] %vm1868, %v1841
        %1907 = vst.msk [vmem:[%s195 + $0x130] sm:$0xff] %vm1868, %v1842
        %1908 = vst.msk [vmem:[%s195 + $0x138] sm:$0xff] %vm1868, %v1843
        %1909 = vst.msk [vmem:[%s195 + $0x140] sm:$0xff] %vm1868, %v1844
        %1910 = vst.msk [vmem:[%s195 + $0x148] sm:$0xff] %vm1868, %v1845
        %1911 = vst.msk [vmem:[%s195 + $0x150] sm:$0xff] %vm1868, %v1846
        %1912 = vst.msk [vmem:[%s195 + $0x158] sm:$0xff] %vm1868, %v1847
        %1913 = vst.msk [vmem:[%s195 + $0x160] sm:$0xff] %vm1868, %v1848
        %1914 = vst.msk [vmem:[%s195 + $0x168] sm:$0xff] %vm1868, %v1849
        %1915 = vst.msk [vmem:[%s195 + $0x170] sm:$0xff] %vm1868, %v1850
        %1916 = vst.msk [vmem:[%s195 + $0x178] sm:$0xff] %vm1868, %v1851
        %1917 = vst.msk [vmem:[%s195 + $0x180] sm:$0xff] %vm1868, %v1852
        %1918 = vst.msk [vmem:[%s195 + $0x188] sm:$0xff] %vm1868, %v1853
        %1919 = vst.msk [vmem:[%s195 + $0x190] sm:$0xff] %vm1868, %v1854
        %1920 = vst.msk [vmem:[%s195 + $0x198] sm:$0xff] %vm1868, %v1855
        %1921 = vst.msk [vmem:[%s195 + $0x1a0] sm:$0xff] %vm1868, %v1856
        %1922 = vst.msk [vmem:[%s195 + $0x1a8] sm:$0xff] %vm1868, %v1857
        %1923 = vst.msk [vmem:[%s195 + $0x1b0] sm:$0xff] %vm1868, %v1858
        %1924 = vst.msk [vmem:[%s195 + $0x1b8] sm:$0xff] %vm1868, %v1859
        %1925 = vst.msk [vmem:[%s195 + $0x1c0] sm:$0xff] %vm1868, %v1860
        %1926 = vst.msk [vmem:[%s195 + $0x1c8] sm:$0xff] %vm1868, %v1861
        %1927 = vst.msk [vmem:[%s195 + $0x1d0] sm:$0xff] %vm1868, %v1862
        %1928 = vst.msk [vmem:[%s195 + $0x1d8] sm:$0xff] %vm1868, %v1863
        %1929 = vst.msk [vmem:[%s195 + $0x1e0] sm:$0xff] %vm1868, %v1864
        %1930 = vst.msk [vmem:[%s195 + $0x1e8] sm:$0xff] %vm1868, %v1865
        %1931 = vst.msk [vmem:[%s195 + $0x1f0] sm:$0xff] %vm1868, %v1866
        %1932 = vst.msk [vmem:[%s195 + $0x1f8] sm:$0xff] %vm1868, %v1867
        %p1933 = scmp.eq.s32.totalorder %s25, 1
        // Predicated region
        $region33: #{tpu_custom_call.1} parent=23 // pred_check
          %p1934 = pneg %p1933
        $region34: #{tpu_custom_call.1} parent=23 // pred_check_branch
          %1936 = sbr.rel (%p1934) target = $region36
        $region35: #{tpu_custom_call.1} parent=23 // pred_region
          %v1937 = vld [vmem:[%s195] sm:$0xff]
          %v1938 = vld [vmem:[%s195 + $0x8] sm:$0xff]
          %v1939 = vld [vmem:[%s195 + $0x10] sm:$0xff]
          %v1940 = vld [vmem:[%s195 + $0x18] sm:$0xff]
          %v1941 = vld [vmem:[%s195 + $0x20] sm:$0xff]
          %v1942 = vld [vmem:[%s195 + $0x28] sm:$0xff]
          %v1943 = vld [vmem:[%s195 + $0x30] sm:$0xff]
          %v1944 = vld [vmem:[%s195 + $0x38] sm:$0xff]
          %v1945 = vld [vmem:[%s195 + $0x40] sm:$0xff]
          %v1946 = vld [vmem:[%s195 + $0x48] sm:$0xff]
          %v1947 = vld [vmem:[%s195 + $0x50] sm:$0xff]
          %v1948 = vld [vmem:[%s195 + $0x58] sm:$0xff]
          %v1949 = vld [vmem:[%s195 + $0x60] sm:$0xff]
          %v1950 = vld [vmem:[%s195 + $0x68] sm:$0xff]
          %v1951 = vld [vmem:[%s195 + $0x70] sm:$0xff]
          %v1952 = vld [vmem:[%s195 + $0x78] sm:$0xff]
          %v1953 = vld [vmem:[%s195 + $0x80] sm:$0xff]
          %v1954 = vld [vmem:[%s195 + $0x88] sm:$0xff]
          %v1955 = vld [vmem:[%s195 + $0x90] sm:$0xff]
          %v1956 = vld [vmem:[%s195 + $0x98] sm:$0xff]
          %v1957 = vld [vmem:[%s195 + $0xa0] sm:$0xff]
          %v1958 = vld [vmem:[%s195 + $0xa8] sm:$0xff]
          %v1959 = vld [vmem:[%s195 + $0xb0] sm:$0xff]
          %v1960 = vld [vmem:[%s195 + $0xb8] sm:$0xff]
          %v1961 = vld [vmem:[%s195 + $0xc0] sm:$0xff]
          %v1962 = vld [vmem:[%s195 + $0xc8] sm:$0xff]
          %v1963 = vld [vmem:[%s195 + $0xd0] sm:$0xff]
          %v1964 = vld [vmem:[%s195 + $0xd8] sm:$0xff]
          %v1965 = vld [vmem:[%s195 + $0xe0] sm:$0xff]
          %v1966 = vld [vmem:[%s195 + $0xe8] sm:$0xff]
          %v1967 = vld [vmem:[%s195 + $0xf0] sm:$0xff]
          %v1968 = vld [vmem:[%s195 + $0xf8] sm:$0xff]
          %v1969 = vld [vmem:[%s195 + $0x100] sm:$0xff]
          %v1970 = vld [vmem:[%s195 + $0x108] sm:$0xff]
          %v1971 = vld [vmem:[%s195 + $0x110] sm:$0xff]
          %v1972 = vld [vmem:[%s195 + $0x118] sm:$0xff]
          %v1973 = vld [vmem:[%s195 + $0x120] sm:$0xff]
          %v1974 = vld [vmem:[%s195 + $0x128] sm:$0xff]
          %v1975 = vld [vmem:[%s195 + $0x130] sm:$0xff]
          %v1976 = vld [vmem:[%s195 + $0x138] sm:$0xff]
          %v1977 = vld [vmem:[%s195 + $0x140] sm:$0xff]
          %v1978 = vld [vmem:[%s195 + $0x148] sm:$0xff]
          %v1979 = vld [vmem:[%s195 + $0x150] sm:$0xff]
          %v1980 = vld [vmem:[%s195 + $0x158] sm:$0xff]
          %v1981 = vld [vmem:[%s195 + $0x160] sm:$0xff]
          %v1982 = vld [vmem:[%s195 + $0x168] sm:$0xff]
          %v1983 = vld [vmem:[%s195 + $0x170] sm:$0xff]
          %v1984 = vld [vmem:[%s195 + $0x178] sm:$0xff]
          %v1985 = vld [vmem:[%s195 + $0x180] sm:$0xff]
          %v1986 = vld [vmem:[%s195 + $0x188] sm:$0xff]
          %v1987 = vld [vmem:[%s195 + $0x190] sm:$0xff]
          %v1988 = vld [vmem:[%s195 + $0x198] sm:$0xff]
          %v1989 = vld [vmem:[%s195 + $0x1a0] sm:$0xff]
          %v1990 = vld [vmem:[%s195 + $0x1a8] sm:$0xff]
          %v1991 = vld [vmem:[%s195 + $0x1b0] sm:$0xff]
          %v1992 = vld [vmem:[%s195 + $0x1b8] sm:$0xff]
          %v1993 = vld [vmem:[%s195 + $0x1c0] sm:$0xff]
          %v1994 = vld [vmem:[%s195 + $0x1c8] sm:$0xff]
          %v1995 = vld [vmem:[%s195 + $0x1d0] sm:$0xff]
          %v1996 = vld [vmem:[%s195 + $0x1d8] sm:$0xff]
          %v1997 = vld [vmem:[%s195 + $0x1e0] sm:$0xff]
          %v1998 = vld [vmem:[%s195 + $0x1e8] sm:$0xff]
          %v1999 = vld [vmem:[%s195 + $0x1f0] sm:$0xff]
          %v2000 = vld [vmem:[%s195 + $0x1f8] sm:$0xff]
          %v2001 = vadd.f32 %v1937, 1.0
          %v2002 = vadd.f32 %v1938, 1.0
          %v2003 = vadd.f32 %v1939, 1.0
          %v2004 = vadd.f32 %v1940, 1.0
          %v2005 = vadd.f32 %v1941, 1.0
          %v2006 = vadd.f32 %v1942, 1.0
          %v2007 = vadd.f32 %v1943, 1.0
          %v2008 = vadd.f32 %v1944, 1.0
          %v2009 = vadd.f32 %v1945, 1.0
          %v2010 = vadd.f32 %v1946, 1.0
          %v2011 = vadd.f32 %v1947, 1.0
          %v2012 = vadd.f32 %v1948, 1.0
          %v2013 = vadd.f32 %v1949, 1.0
          %v2014 = vadd.f32 %v1950, 1.0
          %v2015 = vadd.f32 %v1951, 1.0
          %v2016 = vadd.f32 %v1952, 1.0
          %v2017 = vadd.f32 %v1953, 1.0
          %v2018 = vadd.f32 %v1954, 1.0
          %v2019 = vadd.f32 %v1955, 1.0
          %v2020 = vadd.f32 %v1956, 1.0
          %v2021 = vadd.f32 %v1957, 1.0
          %v2022 = vadd.f32 %v1958, 1.0
          %v2023 = vadd.f32 %v1959, 1.0
          %v2024 = vadd.f32 %v1960, 1.0
          %v2025 = vadd.f32 %v1961, 1.0
          %v2026 = vadd.f32 %v1962, 1.0
          %v2027 = vadd.f32 %v1963, 1.0
          %v2028 = vadd.f32 %v1964, 1.0
          %v2029 = vadd.f32 %v1965, 1.0
          %v2030 = vadd.f32 %v1966, 1.0
          %v2031 = vadd.f32 %v1967, 1.0
          %v2032 = vadd.f32 %v1968, 1.0
          %v2033 = vadd.f32 %v1969, 1.0
          %v2034 = vadd.f32 %v1970, 1.0
          %v2035 = vadd.f32 %v1971, 1.0
          %v2036 = vadd.f32 %v1972, 1.0
          %v2037 = vadd.f32 %v1973, 1.0
          %v2038 = vadd.f32 %v1974, 1.0
          %v2039 = vadd.f32 %v1975, 1.0
          %v2040 = vadd.f32 %v1976, 1.0
          %v2041 = vadd.f32 %v1977, 1.0
          %v2042 = vadd.f32 %v1978, 1.0
          %v2043 = vadd.f32 %v1979, 1.0
          %v2044 = vadd.f32 %v1980, 1.0
          %v2045 = vadd.f32 %v1981, 1.0
          %v2046 = vadd.f32 %v1982, 1.0
          %v2047 = vadd.f32 %v1983, 1.0
          %v2048 = vadd.f32 %v1984, 1.0
          %v2049 = vadd.f32 %v1985, 1.0
          %v2050 = vadd.f32 %v1986, 1.0
          %v2051 = vadd.f32 %v1987, 1.0
          %v2052 = vadd.f32 %v1988, 1.0
          %v2053 = vadd.f32 %v1989, 1.0
          %v2054 = vadd.f32 %v1990, 1.0
          %v2055 = vadd.f32 %v1991, 1.0
          %v2056 = vadd.f32 %v1992, 1.0
          %v2057 = vadd.f32 %v1993, 1.0
          %v2058 = vadd.f32 %v1994, 1.0
          %v2059 = vadd.f32 %v1995, 1.0
          %v2060 = vadd.f32 %v1996, 1.0
          %v2061 = vadd.f32 %v1997, 1.0
          %v2062 = vadd.f32 %v1998, 1.0
          %v2063 = vadd.f32 %v1999, 1.0
          %v2064 = vadd.f32 %v2000, 1.0
          %v2065 = vmax.f32 %v2001, 1e-12
          %v2066 = vmax.f32 %v2002, 1e-12
          %v2067 = vmax.f32 %v2003, 1e-12
          %v2068 = vmax.f32 %v2004, 1e-12
          %v2069 = vmax.f32 %v2005, 1e-12
          %v2070 = vmax.f32 %v2006, 1e-12
          %v2071 = vmax.f32 %v2007, 1e-12
          %v2072 = vmax.f32 %v2008, 1e-12
          %v2073 = vmax.f32 %v2009, 1e-12
          %v2074 = vmax.f32 %v2010, 1e-12
          %v2075 = vmax.f32 %v2011, 1e-12
          %v2076 = vmax.f32 %v2012, 1e-12
          %v2077 = vmax.f32 %v2013, 1e-12
          %v2078 = vmax.f32 %v2014, 1e-12
          %v2079 = vmax.f32 %v2015, 1e-12
          %v2080 = vmax.f32 %v2016, 1e-12
          %v2081 = vmax.f32 %v2017, 1e-12
          %v2082 = vmax.f32 %v2018, 1e-12
          %v2083 = vmax.f32 %v2019, 1e-12
          %v2084 = vmax.f32 %v2020, 1e-12
          %v2085 = vmax.f32 %v2021, 1e-12
          %v2086 = vmax.f32 %v2022, 1e-12
          %v2087 = vmax.f32 %v2023, 1e-12
          %v2088 = vmax.f32 %v2024, 1e-12
          %v2089 = vmax.f32 %v2025, 1e-12
          %v2090 = vmax.f32 %v2026, 1e-12
          %v2091 = vmax.f32 %v2027, 1e-12
          %v2092 = vmax.f32 %v2028, 1e-12
          %v2093 = vmax.f32 %v2029, 1e-12
          %v2094 = vmax.f32 %v2030, 1e-12
          %v2095 = vmax.f32 %v2031, 1e-12
          %v2096 = vmax.f32 %v2032, 1e-12
          %v2097 = vmax.f32 %v2033, 1e-12
          %v2098 = vmax.f32 %v2034, 1e-12
          %v2099 = vmax.f32 %v2035, 1e-12
          %v2100 = vmax.f32 %v2036, 1e-12
          %v2101 = vmax.f32 %v2037, 1e-12
          %v2102 = vmax.f32 %v2038, 1e-12
          %v2103 = vmax.f32 %v2039, 1e-12
          %v2104 = vmax.f32 %v2040, 1e-12
          %v2105 = vmax.f32 %v2041, 1e-12
          %v2106 = vmax.f32 %v2042, 1e-12
          %v2107 = vmax.f32 %v2043, 1e-12
          %v2108 = vmax.f32 %v2044, 1e-12
          %v2109 = vmax.f32 %v2045, 1e-12
          %v2110 = vmax.f32 %v2046, 1e-12
          %v2111 = vmax.f32 %v2047, 1e-12
          %v2112 = vmax.f32 %v2048, 1e-12
          %v2113 = vmax.f32 %v2049, 1e-12
          %v2114 = vmax.f32 %v2050, 1e-12
          %v2115 = vmax.f32 %v2051, 1e-12
          %v2116 = vmax.f32 %v2052, 1e-12
          %v2117 = vmax.f32 %v2053, 1e-12
          %v2118 = vmax.f32 %v2054, 1e-12
          %v2119 = vmax.f32 %v2055, 1e-12
          %v2120 = vmax.f32 %v2056, 1e-12
          %v2121 = vmax.f32 %v2057, 1e-12
          %v2122 = vmax.f32 %v2058, 1e-12
          %v2123 = vmax.f32 %v2059, 1e-12
          %v2124 = vmax.f32 %v2060, 1e-12
          %v2125 = vmax.f32 %v2061, 1e-12
          %v2126 = vmax.f32 %v2062, 1e-12
          %v2127 = vmax.f32 %v2063, 1e-12
          %v2128 = vmax.f32 %v2064, 1e-12
          %v2129 = vrsqrt.pop %v2065
          %v2130 = vrsqrt.pop %v2066
          %v2131 = vrsqrt.pop %v2067
          %v2132 = vrsqrt.pop %v2068
          %v2133 = vrsqrt.pop %v2069
          %v2134 = vrsqrt.pop %v2070
          %v2135 = vrsqrt.pop %v2071
          %v2136 = vrsqrt.pop %v2072
          %v2137 = vrsqrt.pop %v2073
          %v2138 = vrsqrt.pop %v2074
          %v2139 = vrsqrt.pop %v2075
          %v2140 = vrsqrt.pop %v2076
          %v2141 = vrsqrt.pop %v2077
          %v2142 = vrsqrt.pop %v2078
          %v2143 = vrsqrt.pop %v2079
          %v2144 = vrsqrt.pop %v2080
          %v2145 = vrsqrt.pop %v2081
          %v2146 = vrsqrt.pop %v2082
          %v2147 = vrsqrt.pop %v2083
          %v2148 = vrsqrt.pop %v2084
          %v2149 = vrsqrt.pop %v2085
          %v2150 = vrsqrt.pop %v2086
          %v2151 = vrsqrt.pop %v2087
          %v2152 = vrsqrt.pop %v2088
          %v2153 = vrsqrt.pop %v2089
          %v2154 = vrsqrt.pop %v2090
          %v2155 = vrsqrt.pop %v2091
          %v2156 = vrsqrt.pop %v2092
          %v2157 = vrsqrt.pop %v2093
          %v2158 = vrsqrt.pop %v2094
          %v2159 = vrsqrt.pop %v2095
          %v2160 = vrsqrt.pop %v2096
          %v2161 = vrsqrt.pop %v2097
          %v2162 = vrsqrt.pop %v2098
          %v2163 = vrsqrt.pop %v2099
          %v2164 = vrsqrt.pop %v2100
          %v2165 = vrsqrt.pop %v2101
          %v2166 = vrsqrt.pop %v2102
          %v2167 = vrsqrt.pop %v2103
          %v2168 = vrsqrt.pop %v2104
          %v2169 = vrsqrt.pop %v2105
          %v2170 = vrsqrt.pop %v2106
          %v2171 = vrsqrt.pop %v2107
          %v2172 = vrsqrt.pop %v2108
          %v2173 = vrsqrt.pop %v2109
          %v2174 = vrsqrt.pop %v2110
          %v2175 = vrsqrt.pop %v2111
          %v2176 = vrsqrt.pop %v2112
          %v2177 = vrsqrt.pop %v2113
          %v2178 = vrsqrt.pop %v2114
          %v2179 = vrsqrt.pop %v2115
          %v2180 = vrsqrt.pop %v2116
          %v2181 = vrsqrt.pop %v2117
          %v2182 = vrsqrt.pop %v2118
          %v2183 = vrsqrt.pop %v2119
          %v2184 = vrsqrt.pop %v2120
          %v2185 = vrsqrt.pop %v2121
          %v2186 = vrsqrt.pop %v2122
          %v2187 = vrsqrt.pop %v2123
          %v2188 = vrsqrt.pop %v2124
          %v2189 = vrsqrt.pop %v2125
          %v2190 = vrsqrt.pop %v2126
          %v2191 = vrsqrt.pop %v2127
          %v2192 = vrsqrt.pop %v2128
          %2193 = vst.msk [vmem:[%s195] sm:$0xff] %vm1868, %v2129
          %2194 = vst.msk [vmem:[%s195 + $0x8] sm:$0xff] %vm1868, %v2130
          %2195 = vst.msk [vmem:[%s195 + $0x10] sm:$0xff] %vm1868, %v2131
          %2196 = vst.msk [vmem:[%s195 + $0x18] sm:$0xff] %vm1868, %v2132
          %2197 = vst.msk [vmem:[%s195 + $0x20] sm:$0xff] %vm1868, %v2133
          %2198 = vst.msk [vmem:[%s195 + $0x28] sm:$0xff] %vm1868, %v2134
          %2199 = vst.msk [vmem:[%s195 + $0x30] sm:$0xff] %vm1868, %v2135
          %2200 = vst.msk [vmem:[%s195 + $0x38] sm:$0xff] %vm1868, %v2136
          %2201 = vst.msk [vmem:[%s195 + $0x40] sm:$0xff] %vm1868, %v2137
          %2202 = vst.msk [vmem:[%s195 + $0x48] sm:$0xff] %vm1868, %v2138
          %2203 = vst.msk [vmem:[%s195 + $0x50] sm:$0xff] %vm1868, %v2139
          %2204 = vst.msk [vmem:[%s195 + $0x58] sm:$0xff] %vm1868, %v2140
          %2205 = vst.msk [vmem:[%s195 + $0x60] sm:$0xff] %vm1868, %v2141
          %2206 = vst.msk [vmem:[%s195 + $0x68] sm:$0xff] %vm1868, %v2142
          %2207 = vst.msk [vmem:[%s195 + $0x70] sm:$0xff] %vm1868, %v2143
          %2208 = vst.msk [vmem:[%s195 + $0x78] sm:$0xff] %vm1868, %v2144
          %2209 = vst.msk [vmem:[%s195 + $0x80] sm:$0xff] %vm1868, %v2145
          %2210 = vst.msk [vmem:[%s195 + $0x88] sm:$0xff] %vm1868, %v2146
          %2211 = vst.msk [vmem:[%s195 + $0x90] sm:$0xff] %vm1868, %v2147
          %2212 = vst.msk [vmem:[%s195 + $0x98] sm:$0xff] %vm1868, %v2148
          %2213 = vst.msk [vmem:[%s195 + $0xa0] sm:$0xff] %vm1868, %v2149
          %2214 = vst.msk [vmem:[%s195 + $0xa8] sm:$0xff] %vm1868, %v2150
          %2215 = vst.msk [vmem:[%s195 + $0xb0] sm:$0xff] %vm1868, %v2151
          %2216 = vst.msk [vmem:[%s195 + $0xb8] sm:$0xff] %vm1868, %v2152
          %2217 = vst.msk [vmem:[%s195 + $0xc0] sm:$0xff] %vm1868, %v2153
          %2218 = vst.msk [vmem:[%s195 + $0xc8] sm:$0xff] %vm1868, %v2154
          %2219 = vst.msk [vmem:[%s195 + $0xd0] sm:$0xff] %vm1868, %v2155
          %2220 = vst.msk [vmem:[%s195 + $0xd8] sm:$0xff] %vm1868, %v2156
          %2221 = vst.msk [vmem:[%s195 + $0xe0] sm:$0xff] %vm1868, %v2157
          %2222 = vst.msk [vmem:[%s195 + $0xe8] sm:$0xff] %vm1868, %v2158
          %2223 = vst.msk [vmem:[%s195 + $0xf0] sm:$0xff] %vm1868, %v2159
          %2224 = vst.msk [vmem:[%s195 + $0xf8] sm:$0xff] %vm1868, %v2160
          %2225 = vst.msk [vmem:[%s195 + $0x100] sm:$0xff] %vm1868, %v2161
          %2226 = vst.msk [vmem:[%s195 + $0x108] sm:$0xff] %vm1868, %v2162
          %2227 = vst.msk [vmem:[%s195 + $0x110] sm:$0xff] %vm1868, %v2163
          %2228 = vst.msk [vmem:[%s195 + $0x118] sm:$0xff] %vm1868, %v2164
          %2229 = vst.msk [vmem:[%s195 + $0x120] sm:$0xff] %vm1868, %v2165
          %2230 = vst.msk [vmem:[%s195 + $0x128] sm:$0xff] %vm1868, %v2166
          %2231 = vst.msk [vmem:[%s195 + $0x130] sm:$0xff] %vm1868, %v2167
          %2232 = vst.msk [vmem:[%s195 + $0x138] sm:$0xff] %vm1868, %v2168
          %2233 = vst.msk [vmem:[%s195 + $0x140] sm:$0xff] %vm1868, %v2169
          %2234 = vst.msk [vmem:[%s195 + $0x148] sm:$0xff] %vm1868, %v2170
          %2235 = vst.msk [vmem:[%s195 + $0x150] sm:$0xff] %vm1868, %v2171
          %2236 = vst.msk [vmem:[%s195 + $0x158] sm:$0xff] %vm1868, %v2172
          %2237 = vst.msk [vmem:[%s195 + $0x160] sm:$0xff] %vm1868, %v2173
          %2238 = vst.msk [vmem:[%s195 + $0x168] sm:$0xff] %vm1868, %v2174
          %2239 = vst.msk [vmem:[%s195 + $0x170] sm:$0xff] %vm1868, %v2175
          %2240 = vst.msk [vmem:[%s195 + $0x178] sm:$0xff] %vm1868, %v2176
          %2241 = vst.msk [vmem:[%s195 + $0x180] sm:$0xff] %vm1868, %v2177
          %2242 = vst.msk [vmem:[%s195 + $0x188] sm:$0xff] %vm1868, %v2178
          %2243 = vst.msk [vmem:[%s195 + $0x190] sm:$0xff] %vm1868, %v2179
          %2244 = vst.msk [vmem:[%s195 + $0x198] sm:$0xff] %vm1868, %v2180
          %2245 = vst.msk [vmem:[%s195 + $0x1a0] sm:$0xff] %vm1868, %v2181
          %2246 = vst.msk [vmem:[%s195 + $0x1a8] sm:$0xff] %vm1868, %v2182
          %2247 = vst.msk [vmem:[%s195 + $0x1b0] sm:$0xff] %vm1868, %v2183
          %2248 = vst.msk [vmem:[%s195 + $0x1b8] sm:$0xff] %vm1868, %v2184
          %2249 = vst.msk [vmem:[%s195 + $0x1c0] sm:$0xff] %vm1868, %v2185
          %2250 = vst.msk [vmem:[%s195 + $0x1c8] sm:$0xff] %vm1868, %v2186
          %2251 = vst.msk [vmem:[%s195 + $0x1d0] sm:$0xff] %vm1868, %v2187
          %2252 = vst.msk [vmem:[%s195 + $0x1d8] sm:$0xff] %vm1868, %v2188
          %2253 = vst.msk [vmem:[%s195 + $0x1e0] sm:$0xff] %vm1868, %v2189
          %2254 = vst.msk [vmem:[%s195 + $0x1e8] sm:$0xff] %vm1868, %v2190
          %2255 = vst.msk [vmem:[%s195 + $0x1f0] sm:$0xff] %vm1868, %v2191
          %2256 = vst.msk [vmem:[%s195 + $0x1f8] sm:$0xff] %vm1868, %v2192
        $region36: #{tpu_custom_call.1} parent=23 // pred_fallthru
          _
        %s2257 = smul.u32 64, %s24
        %p2258 = scmp.lt.s32.totalorder %s2257, 127
        %s2259 = scalar_select %p2258, %s2257, 127
        %s2260 = smul.addr %s2259, 8
        %s2261 = scalar_lea.vmem %s1, %s2260
        %s2262 = sand.u32 %s96, 1
        %s2263 = scalar_lea.sflag [#allocation4], %s2262
        %s2264 = sand.u32 %s96, 1
        %s2265 = smul.addr %s2264, 1024
        %s2266 = scalar_lea.vmem [#allocation5], %s2265
        // Predicated region
        $region37: #{tpu_custom_call.1} parent=23 // pred_check
          %p2267 = pneg %p78
        $region38: #{tpu_custom_call.1} parent=23 // pred_check_branch
          %2269 = sbr.rel (%p2267) target = $region40
        $region39: #{tpu_custom_call.1} parent=23 // pred_region
          %s2270 = smul.u32 64, %s24
        $region40: #{tpu_custom_call.1} parent=23 // pred_fallthru
          _
        // Predicated region
        $region41: #{tpu_custom_call.1} parent=23 // pred_check
          %p2271 = pneg %p106
        $region42: #{tpu_custom_call.1} parent=23 // pred_check_branch
          %2273 = sbr.rel (%p2271) target = $region44
        $region43: #{tpu_custom_call.1} parent=23 // pred_region
          %s2274 = smul.u32 64, %s24
          %s2275 = smul.u32 4, %s25
          %s2277 = ssub.s32 16384, 16384
          %2278 = vsyncadd %s2263, %s2277
          %s2279 = smul.addr %s2274, 8
          %s2280 = sadd.s32 %s2275, %s2279
          %s2281 = smul.addr %s2280, 64
          %s2282 = scalar_lea.hbm %s2, %s2281
          %s2283 = sshll.u32 %s2266, 4
          %s2284 = int_to_ptr.vmem [resolvable:$true] %s2283
          %2289 = dma.vmem_to_hbm [thread:$0]  %s2284, 16384, %s2282, %s2263, 256, 512, 16
        $region44: #{tpu_custom_call.1} parent=23 // pred_fallthru
          _
      $region24: #{tpu_custom_call.1} parent=5 // pred_fallthru
        _
      %p2290 = scmp.le.s32.totalorder 2, %s15
      // Predicated region
      $region45: #{tpu_custom_call.1} parent=5 // pred_check
        %p2291 = pneg %p2290
      $region46: #{tpu_custom_call.1} parent=5 // pred_check_branch
        %2293 = sbr.rel (%p2291) target = $region48
      $region47: #{tpu_custom_call.1} parent=5 // pred_region
        %s2294 = ssub.s32 %s15, 2
        // Predicated region
        $region49: #{tpu_custom_call.1} parent=47 // pred_check
          %p2295 = pneg %p84
        $region50: #{tpu_custom_call.1} parent=47 // pred_check_branch
          %2297 = sbr.rel (%p2295) target = $region52
        $region51: #{tpu_custom_call.1} parent=47 // pred_region
          %s2298 = smul.u32 64, %s26
          %p2299 = scmp.lt.s32.totalorder %s2298, 127
          %s2300 = scalar_select %p2299, %s2298, 127
          %s2301 = smul.addr %s2300, 8
          %s2302 = scalar_lea.vmem %s1, %s2301
        $region52: #{tpu_custom_call.1} parent=47 // pred_fallthru
          _
        // Predicated region
        $region53: #{tpu_custom_call.1} parent=47 // pred_check
          %p2303 = pneg %p112
        $region54: #{tpu_custom_call.1} parent=47 // pred_check_branch
          %2305 = sbr.rel (%p2303) target = $region56
        $region55: #{tpu_custom_call.1} parent=47 // pred_region
          %s2306 = sand.u32 %s97, 1
          %s2307 = scalar_lea.sflag [#allocation4], %s2306
          %s2308 = sand.u32 %s97, 1
          %s2309 = smul.addr %s2308, 1024
          %s2310 = scalar_lea.vmem [#allocation5], %s2309
          %2311 = dma.done %s2307, 16384
        $region56: #{tpu_custom_call.1} parent=47 // pred_fallthru
          _
      $region48: #{tpu_custom_call.1} parent=5 // pred_fallthru
        _
    $region6: #{tpu_custom_call.1} parent=1 // loop_footer
      %s19 = sadd.s32 1, %s15
    $region7: #{tpu_custom_call.1} parent=1 // loop_footer_branch
      %14 = sbr.rel target = $region3
    $region8: #{tpu_custom_call.1} parent=1 // loop_exit
      _
    %2312 = vsyncpa [#allocation3], 1
    %s2313 = scalar_lea.sflag [#allocation3], 1
    %2314 = vsyncpa %s2313, 1
    %2315 = vsyncpa [#allocation4], 1
    %s2316 = scalar_lea.sflag [#allocation4], 1
    %2317 = vsyncpa %s2316, 1

</llo_original>
